<compile_context>
chip_gen: v7x
topology: tpu7x:2x2x1
jax: 0.10.0
libtpu: 0.0.40
codegen_flags: <defaults>
</compile_context>

<pallas_src>
import functools
import math

import jax
import jax.numpy as jnp
from jax.experimental import pallas as pl
from jax.experimental.pallas import tpu as pltpu

NEG_INF = -1e30        # finite additive mask for non-edges (avoids NaN on padded rows)
NEG_SLOPE = 0.2        # GATConv LeakyReLU default
HEADS = 2
VMEM_LIMIT = 48 * 1024 * 1024   # <= 48 MiB: safe on v5e/v6e (128 MiB) and v7x (64 MiB)


def _round_up(x, m):
    return (x + m - 1) // m * m


def _pad_to(a, shape):
    return jnp.pad(a, [(0, s - d) for d, s in zip(a.shape, shape)])


def _choose_block_rows(n_pad):
    if n_pad <= 256:
        return n_pad                       # single grid step
    return 256 if n_pad % 256 == 0 else 128


# --------------------------------------------------------------------------------------
# Kernel 1 (per layer): fused-heads projection + per-source attention scores.
#   x_ref    : (block_rows, Fin_pad)          row tile of node features
#   wcat_ref : (Fin_pad, heads*Fout_pad)      [W_0 | W_1]  (resident)
#   asrc_ref : (heads, Fout_pad)              att_src      (resident)
#   hcat_ref : (heads, block_rows, Fout_pad)  projected features per head
#   ssrc_ref : (heads, block_rows)            s_src laid out along lanes
# --------------------------------------------------------------------------------------
def gat_project_kernel(x_ref, wcat_ref, asrc_ref, hcat_ref, ssrc_ref, *,
                       heads, f_out_pad):
    # Single 256-wide matmul covers both heads (matches the 2x256 MXU on v6e/v7x).
    h_cat = jnp.dot(x_ref[...], wcat_ref[...], preferred_element_type=jnp.float32)
    src_rows = []
    for k in range(heads):                                    # heads=2: static unroll
        h_k = h_cat[:, k * f_out_pad:(k + 1) * f_out_pad]     # (block_rows, Fout_pad)
        hcat_ref[k] = h_k
        # s_src_k laid out lane-wise: (1, block_rows) = a_src_k (1,F) · h_k^T.
        src_rows.append(jax.lax.dot_general(
            asrc_ref[k:k + 1, :], h_k,
            dimension_numbers=(((1,), (1,)), ((), ())),
            preferred_element_type=jnp.float32))
    ssrc_ref[...] = jnp.concatenate(src_rows, axis=0)         # (heads, block_rows)


# --------------------------------------------------------------------------------------
# Kernel 2 (per layer): masked softmax attention + aggregation for a tile of target rows.
#   hcat_ref : (heads, N_pad, Fout_pad)   resident (constant index_map)
#   ssrc_ref : (heads, N_pad)             resident
#   adst_ref : (heads, Fout_pad)          resident
#   b_ref    : (1, Fout_pad)              resident
#   adj_ref  : (block_rows, N_pad) int8   streamed mask rows (1 edge / 0 non-edge)
#   out_ref  : (block_rows, Fout_pad)
# --------------------------------------------------------------------------------------
def gat_attn_kernel(hcat_ref, ssrc_ref, adst_ref, b_ref, adj_ref, out_ref, *,
                    heads, block_rows, negative_slope):
    row0 = pl.multiple_of(pl.program_id(0) * block_rows, block_rows)

    # Expand the compact int8 mask once per tile into an additive f32 bias
    # (0 on edges, -1e30 elsewhere) shared by both heads.
    maskf = adj_ref[...].astype(jnp.float32)
    mask_bias = (maskf - 1.0) * jnp.float32(-NEG_INF)

    acc = jnp.zeros(out_ref.shape, jnp.float32)
    for k in range(heads):                                    # heads=2: static unroll
        h_k = hcat_ref[k]                                     # (N_pad, Fout_pad)
        h_rows = hcat_ref[k, pl.ds(row0, block_rows), :]      # target rows of this tile
        s_dst = jnp.sum(h_rows * adst_ref[k:k + 1, :], axis=-1, keepdims=True)  # (bm,1)
        e = s_dst + ssrc_ref[k:k + 1, :]                      # (block_rows, N_pad)
        e = jnp.where(e > 0, e, negative_slope * e)           # LeakyReLU(0.2)
        logits = e + mask_bias
        m = jnp.max(logits, axis=-1, keepdims=True)
        p = jnp.exp(logits - m)                               # unnormalized weights
        denom = jnp.sum(p, axis=-1, keepdims=True)
        # Deferred normalization: matmul first, then one (bm, Fout) multiply by 1/denom.
        contrib = jnp.dot(p, h_k, preferred_element_type=jnp.float32)
        acc = acc + contrib * pl.reciprocal(denom, approx=True)
        # TODO(synk): training-mode dropout(0.5) on the attention weights (Bernoulli mask
        #             via pltpu.prng_random_bits) not emitted — eval-mode identity.

    out_ref[...] = (acc * (1.0 / heads) + b_ref[...]).astype(out_ref.dtype)


# --------------------------------------------------------------------------------------
# One GAT layer = projection pallas_call + attention pallas_call.
# --------------------------------------------------------------------------------------
def _gat_layer(x_pad, adj_mask, w_cat, a_src, a_dst, b, *, block_rows):
    n_pad, f_in_pad = x_pad.shape
    heads, f_out_pad = a_src.shape
    grid = (n_pad // block_rows,)

    h_heads, s_src = pl.pallas_call(
        functools.partial(gat_project_kernel, heads=heads, f_out_pad=f_out_pad),
        out_shape=(
            jax.ShapeDtypeStruct((heads, n_pad, f_out_pad), jnp.float32),
            jax.ShapeDtypeStruct((heads, n_pad), jnp.float32),
        ),
        grid=grid,
        in_specs=[
            pl.BlockSpec((block_rows, f_in_pad), lambda i: (i, 0)),          # x rows
            pl.BlockSpec((f_in_pad, heads * f_out_pad), lambda i: (0, 0)),   # W_cat
            pl.BlockSpec((heads, f_out_pad), lambda i: (0, 0)),              # att_src
        ],
        out_specs=(
            pl.BlockSpec((heads, block_rows, f_out_pad), lambda i: (0, i, 0)),
            pl.BlockSpec((heads, block_rows), lambda i: (0, i)),
        ),
        compiler_params=pltpu.CompilerParams(
            dimension_semantics=("parallel",), vmem_limit_bytes=VMEM_LIMIT),
        cost_estimate=pl.CostEstimate(
            flops=2 * n_pad * f_in_pad * heads * f_out_pad,
            transcendentals=0,
            bytes_accessed=4 * (n_pad * f_in_pad + f_in_pad * heads * f_out_pad
                                + heads * n_pad * f_out_pad + heads * n_pad)),
    )(x_pad, w_cat, a_src)

    out = pl.pallas_call(
        functools.partial(gat_attn_kernel, heads=heads, block_rows=block_rows,
                          negative_slope=NEG_SLOPE),
        out_shape=jax.ShapeDtypeStruct((n_pad, f_out_pad), jnp.float32),
        grid=grid,
        in_specs=[
            pl.BlockSpec((heads, n_pad, f_out_pad), lambda i: (0, 0, 0)),    # h (resident)
            pl.BlockSpec((heads, n_pad), lambda i: (0, 0)),                  # s_src (resident)
            pl.BlockSpec((heads, f_out_pad), lambda i: (0, 0)),              # att_dst
            pl.BlockSpec((1, f_out_pad), lambda i: (0, 0)),                  # bias
            pl.BlockSpec((block_rows, n_pad), lambda i: (i, 0)),             # int8 mask rows
        ],
        out_specs=pl.BlockSpec((block_rows, f_out_pad), lambda i: (i, 0)),
        compiler_params=pltpu.CompilerParams(
            dimension_semantics=("parallel",), vmem_limit_bytes=VMEM_LIMIT),
        cost_estimate=pl.CostEstimate(
            flops=heads * (2 * n_pad * n_pad * f_out_pad + 8 * n_pad * n_pad),
            transcendentals=heads * n_pad * n_pad,
            bytes_accessed=n_pad * n_pad
                           + 4 * (heads * n_pad * f_out_pad + n_pad * f_out_pad)),
    )(h_heads, s_src, a_dst, b, adj_mask)
    return out


def _cat_heads(w, f_in_pad, f_out_pad):
    """(heads, Fin, Fout) -> padded (Fin_pad, heads*Fout_pad) fused-heads layout."""
    heads = w.shape[0]
    w_p = _pad_to(w, (heads, f_in_pad, f_out_pad))
    return jnp.transpose(w_p, (1, 0, 2)).reshape(f_in_pad, heads * f_out_pad)


def _edge_mask(edge_index, num_nodes, n_pad):
    """Compact int8 mask (n_pad, n_pad): 1 where edge src->dst exists (+ self loops)."""
    mask = jnp.zeros((n_pad, n_pad), jnp.int32)
    mask = mask.at[edge_index[1], edge_index[0]].set(1)   # edge j -> i  =>  row i, col j
    idx = jnp.arange(num_nodes)
    mask = mask.at[idx, idx].set(1)                       # PyG add_self_loops=True default
    # TODO(synk): duplicate parallel edges collapse to one entry in this dense mask,
    #             whereas PyG's sparse softmax would count each copy separately.
    return mask.astype(jnp.int8)


@functools.partial(jax.jit, static_argnames=("block_rows",))
def gat_forward(X, edge_index, params, block_rows=None):
    """Full 2-layer GAT forward (eval mode). Pads, runs 2x(projection+attention), unpads."""
    N, f_in = X.shape
    heads = params["w1"].shape[0]
    hidden = params["w1"].shape[2]
    num_outputs = params["w2"].shape[2]

    n_pad = _round_up(N, 128)                 # lane-dense source axis
    if block_rows is None or block_rows % 128 != 0 or n_pad % block_rows != 0:
        block_rows = _choose_block_rows(n_pad)

    f_in_pad = _round_up(f_in, 128)
    hid_pad = _round_up(hidden, 128)
    out_pad = _round_up(num_outputs, 128)     # lane-dense output store; sliced below

    x_pad = _pad_to(X.astype(jnp.float32), (n_pad, f_in_pad))
    adj_mask = _edge_mask(edge_index, N, n_pad)

    w1_cat = _cat_heads(params["w1"], f_in_pad, hid_pad)
    a_src1 = _pad_to(params["a_src1"], (heads, hid_pad))
    a_dst1 = _pad_to(params["a_dst1"], (heads, hid_pad))
    b1 = _pad_to(params["b1"][None, :], (1, hid_pad))

    w2_cat = _cat_heads(params["w2"], hid_pad, out_pad)
    a_src2 = _pad_to(params["a_src2"], (heads, out_pad))
    a_dst2 = _pad_to(params["a_dst2"], (heads, out_pad))
    b2 = _pad_to(params["b2"][None, :], (1, out_pad))

    h1 = _gat_layer(x_pad, adj_mask, w1_cat, a_src1, a_dst1, b1, block_rows=block_rows)
    h2 = _gat_layer(h1, adj_mask, w2_cat, a_src2, a_dst2, b2, block_rows=block_rows)
    return h2[:N, :num_outputs]


# --------------------------------------------------------------------------------------
# Params + pure-JAX reference
# --------------------------------------------------------------------------------------
def init_params(key, init_feat, num_hidden, num_outputs, heads=HEADS):
    def glorot(k, shape):
        fan_in, fan_out = shape[-2], shape[-1]
        lim = math.sqrt(6.0 / (fan_in + fan_out))
        return jax.random.uniform(k, shape, jnp.float32, -lim, lim)

    ks = jax.random.split(key, 6)
    return dict(
        w1=glorot(ks[0], (heads, init_feat, num_hidden)),
        a_src1=glorot(ks[1], (heads, num_hidden)),
        a_dst1=glorot(ks[2], (heads, num_hidden)),
        b1=jnp.zeros((num_hidden,), jnp.float32),
        w2=glorot(ks[3], (heads, num_hidden, num_outputs)),
        a_src2=glorot(ks[4], (heads, num_outputs)),
        a_dst2=glorot(ks[5], (heads, num_outputs)),
        b2=jnp.zeros((num_outputs,), jnp.float32),
    )


def _gat_layer_ref(x, bias_mask, w, a_src, a_dst, b):
    hp = jax.lax.Precision.HIGHEST
    outs = []
    for k in range(w.shape[0]):
        h = jnp.dot(x, w[k], precision=hp)
        s_src = jnp.dot(h, a_src[k], precision=hp)
        s_dst = jnp.dot(h, a_dst[k], precision=hp)
        e = s_dst[:, None] + s_src[None, :]
        e = jnp.where(e > 0, e, NEG_SLOPE * e)
        alpha = jax.nn.softmax(e + bias_mask, axis=-1)
        outs.append(jnp.dot(alpha, h, precision=hp))
    return sum(outs) / w.shape[0] + b


def gat_reference(X, edge_index, params):
    N = X.shape[0]
    maskf = _edge_mask(edge_index, N, N).astype(jnp.float32)
    bias_mask = (maskf - 1.0) * (-NEG_INF)
    h = _gat_layer_ref(X, bias_mask, params["w1"], params["a_src1"], params["a_dst1"], params["b1"])
    return _gat_layer_ref(h, bias_mask, params["w2"], params["a_src2"], params["a_dst2"], params["b2"])


if __name__ == "__main__":
    key = jax.random.PRNGKey(0)
    k_x, k_src, k_dst, k_p = jax.random.split(key, 4)

    NUM_NODES, INIT_FEAT, NUM_HIDDEN, NUM_OUTPUTS = 64, 64, 32, 8
    NUM_EDGES = 256

    # Learnable node-embedding table self.X (xavier-uniform, as in the module)
    lim = math.sqrt(6.0 / (NUM_NODES + INIT_FEAT))
    X = jax.random.uniform(k_x, (NUM_NODES, INIT_FEAT), jnp.float32, -lim, lim)

    # Deterministic random edge_index (2, E): row 0 = source nodes, row 1 = target nodes
    src = jax.random.randint(k_src, (NUM_EDGES,), 0, NUM_NODES)
    dst = jax.random.randint(k_dst, (NUM_EDGES,), 0, NUM_NODES)
    edge_index = jnp.stack([src, dst]).astype(jnp.int32)

    params = init_params(k_p, INIT_FEAT, NUM_HIDDEN, NUM_OUTPUTS)

    # N_pad = 128 -> single full-width 128-row tile per layer (block_rows chosen automatically)
    out = gat_forward(X, edge_index, params)
    out = jax.block_until_ready(out)

    ref = gat_reference(X, edge_index, params)
    assert out.shape == (NUM_NODES, NUM_OUTPUTS)
    max_err = float(jnp.max(jnp.abs(out - ref)))
    assert jnp.allclose(out, ref, atol=2e-3, rtol=2e-3), f"mismatch vs reference (max abs err {max_err})"

    print("KERNEL_OK")
</pallas_src>

<mosaic_0001>
module attributes {stable_mosaic.version = 11 : i64} {
  func.func @gat_project_kernel(%arg0: i32, %arg1: memref<128x128xf32, #tpu.memory_space<vmem>>, %arg2: memref<128x256xf32, #tpu.memory_space<vmem>>, %arg3: memref<2x128xf32, #tpu.memory_space<vmem>>, %arg4: memref<2x128x128xf32, #tpu.memory_space<vmem>>, %arg5: memref<2x128xf32, #tpu.memory_space<vmem>>) attributes {dimension_semantics = [#tpu.dimension_semantics<parallel>], iteration_bounds = array<i64: 1>, scalar_prefetch = 0 : i64, scratch_operands = 0 : i64, tpu.core_type = #tpu.core_type<tc>, window_params = [{transform_indices = @transform_0, window_bounds = array<i64: 128, 128>}, {pipeline_mode = #tpu.pipeline_mode<synchronous>, transform_indices = @transform_1, window_bounds = array<i64: 128, 256>}, {pipeline_mode = #tpu.pipeline_mode<synchronous>, transform_indices = @transform_2, window_bounds = array<i64: 2, 128>}, {transform_indices = @transform_3, window_bounds = array<i64: 2, 128, 128>}, {transform_indices = @transform_4, window_bounds = array<i64: 2, 128>}]} {
    %c0 = arith.constant 0 : index
    %c0_0 = arith.constant 0 : index
    %0 = vector.load %arg1[%c0, %c0_0] : memref<128x128xf32, #tpu.memory_space<vmem>>, vector<128x128xf32>
    %c0_1 = arith.constant 0 : index
    %c0_2 = arith.constant 0 : index
    %1 = vector.load %arg2[%c0_1, %c0_2] : memref<128x256xf32, #tpu.memory_space<vmem>>, vector<128x256xf32>
    %cst = arith.constant dense<0.000000e+00> : vector<128x256xf32>
    %2 = tpu.matmul %0, %1, %cst {dimension_numbers = #tpu.dot_dimension_numbers<[1], [0], [0], [1], [0, 0, 1, 1], [], []>} : vector<128x128xf32>, vector<128x256xf32>, vector<128x256xf32> -> vector<128x256xf32>
    %3 = vector.extract_strided_slice %2 {offsets = [0, 0], sizes = [128, 128], strides = [1, 1]} : vector<128x256xf32> to vector<128x128xf32>
    %c0_3 = arith.constant 0 : index
    %c0_4 = arith.constant 0 : index
    %c0_5 = arith.constant 0 : index
    %4 = vector.load %arg4[%c0_3, %c0_4, %c0_5] : memref<2x128x128xf32, #tpu.memory_space<vmem>>, vector<1x128x128xf32>
    %5 = vector.shape_cast %4 : vector<1x128x128xf32> to vector<128x128xf32>
    %6 = vector.shape_cast %3 : vector<128x128xf32> to vector<1x128x128xf32>
    tpu.vector_store %arg4[%c0_3, %c0_4, %c0_5], %6 {strides = array<i32>} : memref<2x128x128xf32, #tpu.memory_space<vmem>>, vector<1x128x128xf32>,
    %c0_6 = arith.constant 0 : index
    %c0_7 = arith.constant 0 : index
    %7 = vector.load %arg3[%c0_6, %c0_7] : memref<2x128xf32, #tpu.memory_space<vmem>>, vector<1x128xf32>
    %cst_8 = arith.constant dense<0.000000e+00> : vector<1x128xf32>
    %8 = tpu.matmul %7, %3, %cst_8 {dimension_numbers = #tpu.dot_dimension_numbers<[1], [1], [0], [0], [0, 0, 1, 0], [], []>} : vector<1x128xf32>, vector<128x128xf32>, vector<1x128xf32> -> vector<1x128xf32>
    %9 = vector.extract_strided_slice %2 {offsets = [0, 128], sizes = [128, 128], strides = [1, 1]} : vector<128x256xf32> to vector<128x128xf32>
    %c1 = arith.constant 1 : index
    %c0_9 = arith.constant 0 : index
    %c0_10 = arith.constant 0 : index
    %10 = vector.load %arg4[%c1, %c0_9, %c0_10] : memref<2x128x128xf32, #tpu.memory_space<vmem>>, vector<1x128x128xf32>
    %11 = vector.shape_cast %10 : vector<1x128x128xf32> to vector<128x128xf32>
    %12 = vector.shape_cast %9 : vector<128x128xf32> to vector<1x128x128xf32>
    tpu.vector_store %arg4[%c1, %c0_9, %c0_10], %12 {strides = array<i32>} : memref<2x128x128xf32, #tpu.memory_space<vmem>>, vector<1x128x128xf32>,
    %c1_11 = arith.constant 1 : index
    %c0_12 = arith.constant 0 : index
    %13 = vector.load %arg3[%c1_11, %c0_12] : memref<2x128xf32, #tpu.memory_space<vmem>>, vector<1x128xf32>
    %cst_13 = arith.constant dense<0.000000e+00> : vector<1x128xf32>
    %14 = tpu.matmul %13, %9, %cst_13 {dimension_numbers = #tpu.dot_dimension_numbers<[1], [1], [0], [0], [0, 0, 1, 0], [], []>} : vector<1x128xf32>, vector<128x128xf32>, vector<1x128xf32> -> vector<1x128xf32>
    %15 = tpu.concatenate %8, %14 in 0 : vector<1x128xf32>, vector<1x128xf32> -> vector<2x128xf32>
    %c0_14 = arith.constant 0 : index
    %c0_15 = arith.constant 0 : index
    %16 = vector.load %arg5[%c0_14, %c0_15] : memref<2x128xf32, #tpu.memory_space<vmem>>, vector<2x128xf32>
    tpu.vector_store %arg5[%c0_14, %c0_15], %15 {strides = array<i32>} : memref<2x128xf32, #tpu.memory_space<vmem>>, vector<2x128xf32>,
    return
  }
  func.func @transform_0(%arg0: i32) -> (i32, i32) {
    %c0_i32 = arith.constant 0 : i32
    %c0_i32_0 = arith.constant 0 : i32
    return %arg0, %c0_i32 : i32, i32
  }
  func.func @transform_1(%arg0: i32) -> (i32, i32) {
    %c0_i32 = arith.constant 0 : i32
    %c0_i32_0 = arith.constant 0 : i32
    %c0_i32_1 = arith.constant 0 : i32
    return %c0_i32, %c0_i32_0 : i32, i32
  }
  func.func @transform_2(%arg0: i32) -> (i32, i32) {
    %c0_i32 = arith.constant 0 : i32
    %c0_i32_0 = arith.constant 0 : i32
    %c0_i32_1 = arith.constant 0 : i32
    return %c0_i32, %c0_i32_0 : i32, i32
  }
  func.func @transform_3(%arg0: i32) -> (i32, i32, i32) {
    %c0_i32 = arith.constant 0 : i32
    %c0_i32_0 = arith.constant 0 : i32
    %c0_i32_1 = arith.constant 0 : i32
    return %c0_i32, %arg0, %c0_i32_0 : i32, i32, i32
  }
  func.func @transform_4(%arg0: i32) -> (i32, i32) {
    %c0_i32 = arith.constant 0 : i32
    %c0_i32_0 = arith.constant 0 : i32
    return %c0_i32, %arg0 : i32, i32
  }
}

module attributes {stable_mosaic.version = 11 : i64} {
  func.func @gat_attn_kernel(%arg0: i32, %arg1: memref<2x128x128xf32, #tpu.memory_space<vmem>>, %arg2: memref<2x128xf32, #tpu.memory_space<vmem>>, %arg3: memref<2x128xf32, #tpu.memory_space<vmem>>, %arg4: memref<1x128xf32, #tpu.memory_space<vmem>>, %arg5: memref<128x128xi8, #tpu.memory_space<vmem>>, %arg6: memref<128x128xf32, #tpu.memory_space<vmem>>) attributes {dimension_semantics = [#tpu.dimension_semantics<parallel>], iteration_bounds = array<i64: 1>, scalar_prefetch = 0 : i64, scratch_operands = 0 : i64, tpu.core_type = #tpu.core_type<tc>, window_params = [{pipeline_mode = #tpu.pipeline_mode<synchronous>, transform_indices = @transform_0, window_bounds = array<i64: 2, 128, 128>}, {pipeline_mode = #tpu.pipeline_mode<synchronous>, transform_indices = @transform_1, window_bounds = array<i64: 2, 128>}, {pipeline_mode = #tpu.pipeline_mode<synchronous>, transform_indices = @transform_2, window_bounds = array<i64: 2, 128>}, {pipeline_mode = #tpu.pipeline_mode<synchronous>, transform_indices = @transform_3, window_bounds = array<i64: 1, 128>}, {transform_indices = @transform_4, window_bounds = array<i64: 128, 128>}, {transform_indices = @transform_5, window_bounds = array<i64: 128, 128>}]} {
    %c128_i32 = arith.constant 128 : i32
    %0 = arith.muli %arg0, %c128_i32 : i32
    %1 = tpu.assume_multiple %0, 128 : i32
    %c0 = arith.constant 0 : index
    %c0_0 = arith.constant 0 : index
    %2 = vector.load %arg5[%c0, %c0_0] : memref<128x128xi8, #tpu.memory_space<vmem>>, vector<128x128xi8>
    %3 = arith.sitofp %2 : vector<128x128xi8> to vector<128x128xf32>
    %cst = arith.constant 1.000000e+00 : f32
    %4 = vector.broadcast %cst : f32 to vector<128x128xf32>
    %5 = arith.subf %3, %4 : vector<128x128xf32>
    %cst_1 = arith.constant 1.000000e+30 : f32
    %6 = vector.broadcast %cst_1 : f32 to vector<128x128xf32>
    %7 = arith.mulf %5, %6 : vector<128x128xf32>
    %cst_2 = arith.constant 0.000000e+00 : f32
    %8 = vector.broadcast %cst_2 : f32 to vector<128x128xf32>
    %c0_3 = arith.constant 0 : index
    %c0_4 = arith.constant 0 : index
    %c0_5 = arith.constant 0 : index
    %9 = vector.load %arg1[%c0_3, %c0_4, %c0_5] : memref<2x128x128xf32, #tpu.memory_space<vmem>>, vector<1x128x128xf32>
    %10 = vector.shape_cast %9 : vector<1x128x128xf32> to vector<128x128xf32>
    %c0_6 = arith.constant 0 : index
    %11 = arith.index_cast %1 : i32 to index
    %c0_7 = arith.constant 0 : index
    %12 = vector.load %arg1[%c0_6, %11, %c0_7] : memref<2x128x128xf32, #tpu.memory_space<vmem>>, vector<1x128x128xf32>
    %13 = vector.shape_cast %12 : vector<1x128x128xf32> to vector<128x128xf32>
    %c0_8 = arith.constant 0 : index
    %c0_9 = arith.constant 0 : index
    %14 = vector.load %arg3[%c0_8, %c0_9] : memref<2x128xf32, #tpu.memory_space<vmem>>, vector<1x128xf32>
    %15 = vector.broadcast %14 : vector<1x128xf32> to vector<128x128xf32>
    %16 = arith.mulf %13, %15 : vector<128x128xf32>
    %cst_10 = arith.constant dense<0.000000e+00> : vector<128xf32>
    %17 = vector.multi_reduction <add>, %16, %cst_10 [1] : vector<128x128xf32> to vector<128xf32>
    %18 = vector.shape_cast %17 : vector<128xf32> to vector<128x1xf32>
    %c0_11 = arith.constant 0 : index
    %c0_12 = arith.constant 0 : index
    %19 = vector.load %arg2[%c0_11, %c0_12] : memref<2x128xf32, #tpu.memory_space<vmem>>, vector<1x128xf32>
    %20 = vector.broadcast %18 : vector<128x1xf32> to vector<128x128xf32>
    %21 = vector.broadcast %19 : vector<1x128xf32> to vector<128x128xf32>
    %22 = arith.addf %20, %21 : vector<128x128xf32>
    %cst_13 = arith.constant 0.000000e+00 : f32
    %23 = vector.broadcast %cst_13 : f32 to vector<128x128xf32>
    %24 = arith.cmpf ogt, %22, %23 : vector<128x128xf32>
    %cst_14 = arith.constant 2.000000e-01 : f32
    %25 = vector.broadcast %cst_14 : f32 to vector<128x128xf32>
    %26 = arith.mulf %25, %22 : vector<128x128xf32>
    %27 = arith.select %24, %22, %26 : vector<128x128xi1>, vector<128x128xf32>
    %28 = arith.addf %27, %7 : vector<128x128xf32>
    %cst_15 = arith.constant dense<0xFF800000> : vector<128xf32>
    %29 = vector.multi_reduction <maximumf>, %28, %cst_15 [1] : vector<128x128xf32> to vector<128xf32>
    %30 = vector.shape_cast %29 : vector<128xf32> to vector<128x1xf32>
    %31 = vector.broadcast %30 : vector<128x1xf32> to vector<128x128xf32>
    %32 = arith.subf %28, %31 : vector<128x128xf32>
    %33 = math.exp %32 : vector<128x128xf32>
    %cst_16 = arith.constant dense<0.000000e+00> : vector<128xf32>
    %34 = vector.multi_reduction <add>, %33, %cst_16 [1] : vector<128x128xf32> to vector<128xf32>
    %35 = vector.shape_cast %34 : vector<128xf32> to vector<128x1xf32>
    %cst_17 = arith.constant dense<0.000000e+00> : vector<128x128xf32>
    %36 = tpu.matmul %33, %10, %cst_17 {dimension_numbers = #tpu.dot_dimension_numbers<[1], [0], [0], [1], [0, 0, 1, 1], [], []>} : vector<128x128xf32>, vector<128x128xf32>, vector<128x128xf32> -> vector<128x128xf32>
    %37 = tpu.reciprocal %35 {approx = true} : vector<128x1xf32> -> vector<128x1xf32>
    %38 = vector.broadcast %37 : vector<128x1xf32> to vector<128x128xf32>
    %39 = arith.mulf %36, %38 : vector<128x128xf32>
    %40 = arith.addf %8, %39 : vector<128x128xf32>
    %c1 = arith.constant 1 : index
    %c0_18 = arith.constant 0 : index
    %c0_19 = arith.constant 0 : index
    %41 = vector.load %arg1[%c1, %c0_18, %c0_19] : memref<2x128x128xf32, #tpu.memory_space<vmem>>, vector<1x128x128xf32>
    %42 = vector.shape_cast %41 : vector<1x128x128xf32> to vector<128x128xf32>
    %c1_20 = arith.constant 1 : index
    %43 = arith.index_cast %1 : i32 to index
    %c0_21 = arith.constant 0 : index
    %44 = vector.load %arg1[%c1_20, %43, %c0_21] : memref<2x128x128xf32, #tpu.memory_space<vmem>>, vector<1x128x128xf32>
    %45 = vector.shape_cast %44 : vector<1x128x128xf32> to vector<128x128xf32>
    %c1_22 = arith.constant 1 : index
    %c0_23 = arith.constant 0 : index
    %46 = vector.load %arg3[%c1_22, %c0_23] : memref<2x128xf32, #tpu.memory_space<vmem>>, vector<1x128xf32>
    %47 = vector.broadcast %46 : vector<1x128xf32> to vector<128x128xf32>
    %48 = arith.mulf %45, %47 : vector<128x128xf32>
    %cst_24 = arith.constant dense<0.000000e+00> : vector<128xf32>
    %49 = vector.multi_reduction <add>, %48, %cst_24 [1] : vector<128x128xf32> to vector<128xf32>
    %50 = vector.shape_cast %49 : vector<128xf32> to vector<128x1xf32>
    %c1_25 = arith.constant 1 : index
    %c0_26 = arith.constant 0 : index
    %51 = vector.load %arg2[%c1_25, %c0_26] : memref<2x128xf32, #tpu.memory_space<vmem>>, vector<1x128xf32>
    %52 = vector.broadcast %50 : vector<128x1xf32> to vector<128x128xf32>
    %53 = vector.broadcast %51 : vector<1x128xf32> to vector<128x128xf32>
    %54 = arith.addf %52, %53 : vector<128x128xf32>
    %cst_27 = arith.constant 0.000000e+00 : f32
    %55 = vector.broadcast %cst_27 : f32 to vector<128x128xf32>
    %56 = arith.cmpf ogt, %54, %55 : vector<128x128xf32>
    %cst_28 = arith.constant 2.000000e-01 : f32
    %57 = vector.broadcast %cst_28 : f32 to vector<128x128xf32>
    %58 = arith.mulf %57, %54 : vector<128x128xf32>
    %59 = arith.select %56, %54, %58 : vector<128x128xi1>, vector<128x128xf32>
    %60 = arith.addf %59, %7 : vector<128x128xf32>
    %cst_29 = arith.constant dense<0xFF800000> : vector<128xf32>
    %61 = vector.multi_reduction <maximumf>, %60, %cst_29 [1] : vector<128x128xf32> to vector<128xf32>
    %62 = vector.shape_cast %61 : vector<128xf32> to vector<128x1xf32>
    %63 = vector.broadcast %62 : vector<128x1xf32> to vector<128x128xf32>
    %64 = arith.subf %60, %63 : vector<128x128xf32>
    %65 = math.exp %64 : vector<128x128xf32>
    %cst_30 = arith.constant dense<0.000000e+00> : vector<128xf32>
    %66 = vector.multi_reduction <add>, %65, %cst_30 [1] : vector<128x128xf32> to vector<128xf32>
    %67 = vector.shape_cast %66 : vector<128xf32> to vector<128x1xf32>
    %cst_31 = arith.constant dense<0.000000e+00> : vector<128x128xf32>
    %68 = tpu.matmul %65, %42, %cst_31 {dimension_numbers = #tpu.dot_dimension_numbers<[1], [0], [0], [1], [0, 0, 1, 1], [], []>} : vector<128x128xf32>, vector<128x128xf32>, vector<128x128xf32> -> vector<128x128xf32>
    %69 = tpu.reciprocal %67 {approx = true} : vector<128x1xf32> -> vector<128x1xf32>
    %70 = vector.broadcast %69 : vector<128x1xf32> to vector<128x128xf32>
    %71 = arith.mulf %68, %70 : vector<128x128xf32>
    %72 = arith.addf %40, %71 : vector<128x128xf32>
    %cst_32 = arith.constant 5.000000e-01 : f32
    %73 = vector.broadcast %cst_32 : f32 to vector<128x128xf32>
    %74 = arith.mulf %72, %73 : vector<128x128xf32>
    %c0_33 = arith.constant 0 : index
    %c0_34 = arith.constant 0 : index
    %75 = vector.load %arg4[%c0_33, %c0_34] : memref<1x128xf32, #tpu.memory_space<vmem>>, vector<1x128xf32>
    %76 = vector.broadcast %75 : vector<1x128xf32> to vector<128x128xf32>
    %77 = arith.addf %74, %76 : vector<128x128xf32>
    %c0_35 = arith.constant 0 : index
    %c0_36 = arith.constant 0 : index
    %78 = vector.load %arg6[%c0_35, %c0_36] : memref<128x128xf32, #tpu.memory_space<vmem>>, vector<128x128xf32>
    tpu.vector_store %arg6[%c0_35, %c0_36], %77 {strides = array<i32>} : memref<128x128xf32, #tpu.memory_space<vmem>>, vector<128x128xf32>,
    return
  }
  func.func @transform_0(%arg0: i32) -> (i32, i32, i32) {
    %c0_i32 = arith.constant 0 : i32
    %c0_i32_0 = arith.constant 0 : i32
    %c0_i32_1 = arith.constant 0 : i32
    %c0_i32_2 = arith.constant 0 : i32
    return %c0_i32, %c0_i32_0, %c0_i32_1 : i32, i32, i32
  }
  func.func @transform_1(%arg0: i32) -> (i32, i32) {
    %c0_i32 = arith.constant 0 : i32
    %c0_i32_0 = arith.constant 0 : i32
    %c0_i32_1 = arith.constant 0 : i32
    return %c0_i32, %c0_i32_0 : i32, i32
  }
  func.func @transform_2(%arg0: i32) -> (i32, i32) {
    %c0_i32 = arith.constant 0 : i32
    %c0_i32_0 = arith.constant 0 : i32
    %c0_i32_1 = arith.constant 0 : i32
    return %c0_i32, %c0_i32_0 : i32, i32
  }
  func.func @transform_3(%arg0: i32) -> (i32, i32) {
    %c0_i32 = arith.constant 0 : i32
    %c0_i32_0 = arith.constant 0 : i32
    %c0_i32_1 = arith.constant 0 : i32
    return %c0_i32, %c0_i32_0 : i32, i32
  }
  func.func @transform_4(%arg0: i32) -> (i32, i32) {
    %c0_i32 = arith.constant 0 : i32
    %c0_i32_0 = arith.constant 0 : i32
    return %arg0, %c0_i32 : i32, i32
  }
  func.func @transform_5(%arg0: i32) -> (i32, i32) {
    %c0_i32 = arith.constant 0 : i32
    %c0_i32_0 = arith.constant 0 : i32
    return %arg0, %c0_i32 : i32, i32
  }
}

</mosaic_0001>

<llo_original>
// kernel: gat_forward.4
$region0: #{gat_forward.4}
  #allocation0 [shape = 'u32[]', space=smem, size = 0x4, offset = 0x4, fixed_abs, tag = 'smem constant byte address 0x4 - core index']
  #allocation1 [shape = 'u32[144,128]{1,0:T(1,128)}', space=vmem, size = 0x12000, scoped, tag = 'internal scratch']
  %s0 = inlined_call_operand.vmem [shape: f32[128,128], index: 0, kind: input, shape index: {}]
  %s1 = inlined_call_operand.vmem [shape: f32[128,256], index: 1, kind: input, shape index: {}]
  %s2 = inlined_call_operand.vmem [shape: f32[2,128], index: 2, kind: input, shape index: {}]
  %s3 = inlined_call_operand.vmem [shape: f32[2,128,128], index: 3, kind: output, shape index: {0}]
  %s4 = inlined_call_operand.vmem [shape: f32[2,128], index: 4, kind: output, shape index: {1}]
  %5 = xla_tuple %s3, %s4
  %s6 = sld [smem:[#allocation0]]
  $region30: #{gat_forward.4} parent=0
    _
  %s8 = ssub.s32 1, %s6
  %s9 = scalar_select 0, %s8, %s6
  // Predicated region
  $region2: #{gat_forward.4} parent=0 // pred_check
    _
  $region3: #{gat_forward.4} parent=0 // pred_check_branch
    %11 = sbr.rel (0) target = $region5
  $region4: #{gat_forward.4} parent=0 // pred_region
    _
  $region5: #{gat_forward.4} parent=0 // pred_fallthru
    _
  // Predicated region
  $region6: #{gat_forward.4} parent=0 // pred_check
    _
  $region7: #{gat_forward.4} parent=0 // pred_check_branch
    %13 = sbr.rel (0) target = $region9
  $region8: #{gat_forward.4} parent=0 // pred_region
    _
  $region9: #{gat_forward.4} parent=0 // pred_fallthru
    _
  // Predicated region
  $region10: #{gat_forward.4} parent=0 // pred_check
    _
  $region11: #{gat_forward.4} parent=0 // pred_check_branch
    %15 = sbr.rel (0) target = $region13
  $region12: #{gat_forward.4} parent=0 // pred_region
    _
  $region13: #{gat_forward.4} parent=0 // pred_fallthru
    _
  %v16 = vld [vmem:[%s0] sm:$0xff]
  %v17 = vld [vmem:[%s0 + $0x8] sm:$0xff]
  %v18 = vld [vmem:[%s0 + $0x10] sm:$0xff]
  %v19 = vld [vmem:[%s0 + $0x18] sm:$0xff]
  %v20 = vld [vmem:[%s0 + $0x20] sm:$0xff]
  %v21 = vld [vmem:[%s0 + $0x28] sm:$0xff]
  %v22 = vld [vmem:[%s0 + $0x30] sm:$0xff]
  %v23 = vld [vmem:[%s0 + $0x38] sm:$0xff]
  %v24 = vld [vmem:[%s0 + $0x40] sm:$0xff]
  %v25 = vld [vmem:[%s0 + $0x48] sm:$0xff]
  %v26 = vld [vmem:[%s0 + $0x50] sm:$0xff]
  %v27 = vld [vmem:[%s0 + $0x58] sm:$0xff]
  %v28 = vld [vmem:[%s0 + $0x60] sm:$0xff]
  %v29 = vld [vmem:[%s0 + $0x68] sm:$0xff]
  %v30 = vld [vmem:[%s0 + $0x70] sm:$0xff]
  %v31 = vld [vmem:[%s0 + $0x78] sm:$0xff]
  %v32 = vld [vmem:[%s1] sm:$0xff]
  %v33 = vld [vmem:[%s1 + $0x8] sm:$0xff]
  %v34 = vld [vmem:[%s1 + $0x10] sm:$0xff]
  %v35 = vld [vmem:[%s1 + $0x18] sm:$0xff]
  %v36 = vld [vmem:[%s1 + $0x20] sm:$0xff]
  %v37 = vld [vmem:[%s1 + $0x28] sm:$0xff]
  %v38 = vld [vmem:[%s1 + $0x30] sm:$0xff]
  %v39 = vld [vmem:[%s1 + $0x38] sm:$0xff]
  %v40 = vld [vmem:[%s1 + $0x40] sm:$0xff]
  %v41 = vld [vmem:[%s1 + $0x48] sm:$0xff]
  %v42 = vld [vmem:[%s1 + $0x50] sm:$0xff]
  %v43 = vld [vmem:[%s1 + $0x58] sm:$0xff]
  %v44 = vld [vmem:[%s1 + $0x60] sm:$0xff]
  %v45 = vld [vmem:[%s1 + $0x68] sm:$0xff]
  %v46 = vld [vmem:[%s1 + $0x70] sm:$0xff]
  %v47 = vld [vmem:[%s1 + $0x78] sm:$0xff]
  %v48 = vld [vmem:[%s1 + $0x80] sm:$0xff]
  %v49 = vld [vmem:[%s1 + $0x88] sm:$0xff]
  %v50 = vld [vmem:[%s1 + $0x90] sm:$0xff]
  %v51 = vld [vmem:[%s1 + $0x98] sm:$0xff]
  %v52 = vld [vmem:[%s1 + $0xa0] sm:$0xff]
  %v53 = vld [vmem:[%s1 + $0xa8] sm:$0xff]
  %v54 = vld [vmem:[%s1 + $0xb0] sm:$0xff]
  %v55 = vld [vmem:[%s1 + $0xb8] sm:$0xff]
  %v56 = vld [vmem:[%s1 + $0xc0] sm:$0xff]
  %v57 = vld [vmem:[%s1 + $0xc8] sm:$0xff]
  %v58 = vld [vmem:[%s1 + $0xd0] sm:$0xff]
  %v59 = vld [vmem:[%s1 + $0xd8] sm:$0xff]
  %v60 = vld [vmem:[%s1 + $0xe0] sm:$0xff]
  %v61 = vld [vmem:[%s1 + $0xe8] sm:$0xff]
  %v62 = vld [vmem:[%s1 + $0xf0] sm:$0xff]
  %v63 = vld [vmem:[%s1 + $0xf8] sm:$0xff]
  %64 = vmatprep.subr.mxu0 %v33
  %65 = vmatpush1.msra.mxu0 %v32
  %66 = vmatprep.subr.mxu0 %v35
  %67 = vmatpush1.msra.mxu0 %v34
  %68 = vmatprep.subr.mxu0 %v37
  %69 = vmatpush1.msra.mxu0 %v36
  %70 = vmatprep.subr.mxu0 %v39
  %71 = vmatpush1.msra.mxu0 %v38
  %72 = vmatprep.subr.mxu0 %v41
  %73 = vmatpush1.msra.mxu0 %v40
  %74 = vmatprep.subr.mxu0 %v43
  %75 = vmatpush1.msra.mxu0 %v42
  %76 = vmatprep.subr.mxu0 %v45
  %77 = vmatpush1.msra.mxu0 %v44
  %78 = vmatprep.subr.mxu0 %v47
  %79 = vmatpush1.msra.mxu0 %v46
  %80 = vmatprep.subr.mxu0 %v49
  %81 = vmatpush1.msra.mxu0 %v48
  %82 = vmatprep.subr.mxu0 %v51
  %83 = vmatpush1.msra.mxu0 %v50
  %84 = vmatprep.subr.mxu0 %v53
  %85 = vmatpush1.msra.mxu0 %v52
  %86 = vmatprep.subr.mxu0 %v55
  %87 = vmatpush1.msra.mxu0 %v54
  %88 = vmatprep.subr.mxu0 %v57
  %89 = vmatpush1.msra.mxu0 %v56
  %90 = vmatprep.subr.mxu0 %v59
  %91 = vmatpush1.msra.mxu0 %v58
  %92 = vmatprep.subr.mxu0 %v61
  %93 = vmatpush1.msra.mxu0 %v60
  %94 = vmatprep.subr.mxu0 %v63
  %95 = vmatpush1.msra.mxu0 %v62
  %96 = vmatprep.subr.mxu0 0.0
  %97 = vmatpush1.msra.mxu0 0.0
  %98 = vmatprep.subr.mxu0 0.0
  %99 = vmatpush1.msra.mxu0 0.0
  %100 = vmatprep.subr.mxu0 0.0
  %101 = vmatpush1.msra.mxu0 0.0
  %102 = vmatprep.subr.mxu0 0.0
  %103 = vmatpush1.msra.mxu0 0.0
  %104 = vmatprep.subr.mxu0 0.0
  %105 = vmatpush1.msra.mxu0 0.0
  %106 = vmatprep.subr.mxu0 0.0
  %107 = vmatpush1.msra.mxu0 0.0
  %108 = vmatprep.subr.mxu0 0.0
  %109 = vmatpush1.msra.mxu0 0.0
  %110 = vmatprep.subr.mxu0 0.0
  %111 = vmatpush1.msra.mxu0 0.0
  %112 = vmatprep.subr.mxu0 0.0
  %113 = vmatpush1.msra.mxu0 0.0
  %114 = vmatprep.subr.mxu0 0.0
  %115 = vmatpush1.msra.mxu0 0.0
  %116 = vmatprep.subr.mxu0 0.0
  %117 = vmatpush1.msra.mxu0 0.0
  %118 = vmatprep.subr.mxu0 0.0
  %119 = vmatpush1.msra.mxu0 0.0
  %120 = vmatprep.subr.mxu0 0.0
  %121 = vmatpush1.msra.mxu0 0.0
  %122 = vmatprep.subr.mxu0 0.0
  %123 = vmatpush1.msra.mxu0 0.0
  %124 = vmatprep.subr.mxu0 0.0
  %125 = vmatpush1.msra.mxu0 0.0
  %126 = vmatprep.subr.mxu0 0.0
  %127 = vmatpush1.msra.mxu0 0.0
  %128 = vmatprep.mubr.f32.mxu0 0.0
  %129 = vmatmul.mubr.f32.gmra.mrb[0].mxu0 %v16
  %v130 = vpop.f32.mrb[0].mxu0
  %v131 = vadd.f32 0.0, %v130
  %v132 = vpop.f32.mrb[0].mxu0
  %v133 = vadd.f32 0.0, %v132
  %134 = vmatprep.mubr.f32.mxu0 0.0
  %135 = vmatmul.mubr.f32.gmra.mrb[0].mxu0 %v17
  %v136 = vpop.f32.mrb[0].mxu0
  %v137 = vadd.f32 0.0, %v136
  %v138 = vpop.f32.mrb[0].mxu0
  %v139 = vadd.f32 0.0, %v138
  %140 = vmatprep.mubr.f32.mxu0 0.0
  %141 = vmatmul.mubr.f32.gmra.mrb[0].mxu0 %v18
  %v142 = vpop.f32.mrb[0].mxu0
  %v143 = vadd.f32 0.0, %v142
  %v144 = vpop.f32.mrb[0].mxu0
  %v145 = vadd.f32 0.0, %v144
  %146 = vmatprep.mubr.f32.mxu0 0.0
  %147 = vmatmul.mubr.f32.gmra.mrb[0].mxu0 %v19
  %v148 = vpop.f32.mrb[0].mxu0
  %v149 = vadd.f32 0.0, %v148
  %v150 = vpop.f32.mrb[0].mxu0
  %v151 = vadd.f32 0.0, %v150
  %152 = vmatprep.mubr.f32.mxu0 0.0
  %153 = vmatmul.mubr.f32.gmra.mrb[0].mxu0 %v20
  %v154 = vpop.f32.mrb[0].mxu0
  %v155 = vadd.f32 0.0, %v154
  %v156 = vpop.f32.mrb[0].mxu0
  %v157 = vadd.f32 0.0, %v156
  %158 = vmatprep.mubr.f32.mxu0 0.0
  %159 = vmatmul.mubr.f32.gmra.mrb[0].mxu0 %v21
  %v160 = vpop.f32.mrb[0].mxu0
  %v161 = vadd.f32 0.0, %v160
  %v162 = vpop.f32.mrb[0].mxu0
  %v163 = vadd.f32 0.0, %v162
  %164 = vmatprep.mubr.f32.mxu0 0.0
  %165 = vmatmul.mubr.f32.gmra.mrb[0].mxu0 %v22
  %v166 = vpop.f32.mrb[0].mxu0
  %v167 = vadd.f32 0.0, %v166
  %v168 = vpop.f32.mrb[0].mxu0
  %v169 = vadd.f32 0.0, %v168
  %170 = vmatprep.mubr.f32.mxu0 0.0
  %171 = vmatmul.mubr.f32.gmra.mrb[0].mxu0 %v23
  %v172 = vpop.f32.mrb[0].mxu0
  %v173 = vadd.f32 0.0, %v172
  %v174 = vpop.f32.mrb[0].mxu0
  %v175 = vadd.f32 0.0, %v174
  %176 = vmatprep.mubr.f32.mxu0 0.0
  %177 = vmatmul.mubr.f32.gmra.mrb[0].mxu0 %v24
  %v178 = vpop.f32.mrb[0].mxu0
  %v179 = vadd.f32 0.0, %v178
  %v180 = vpop.f32.mrb[0].mxu0
  %v181 = vadd.f32 0.0, %v180
  %182 = vmatprep.mubr.f32.mxu0 0.0
  %183 = vmatmul.mubr.f32.gmra.mrb[0].mxu0 %v25
  %v184 = vpop.f32.mrb[0].mxu0
  %v185 = vadd.f32 0.0, %v184
  %v186 = vpop.f32.mrb[0].mxu0
  %v187 = vadd.f32 0.0, %v186
  %188 = vmatprep.mubr.f32.mxu0 0.0
  %189 = vmatmul.mubr.f32.gmra.mrb[0].mxu0 %v26
  %v190 = vpop.f32.mrb[0].mxu0
  %v191 = vadd.f32 0.0, %v190
  %v192 = vpop.f32.mrb[0].mxu0
  %v193 = vadd.f32 0.0, %v192
  %194 = vmatprep.mubr.f32.mxu0 0.0
  %195 = vmatmul.mubr.f32.gmra.mrb[0].mxu0 %v27
  %v196 = vpop.f32.mrb[0].mxu0
  %v197 = vadd.f32 0.0, %v196
  %v198 = vpop.f32.mrb[0].mxu0
  %v199 = vadd.f32 0.0, %v198
  %200 = vmatprep.mubr.f32.mxu0 0.0
  %201 = vmatmul.mubr.f32.gmra.mrb[0].mxu0 %v28
  %v202 = vpop.f32.mrb[0].mxu0
  %v203 = vadd.f32 0.0, %v202
  %v204 = vpop.f32.mrb[0].mxu0
  %v205 = vadd.f32 0.0, %v204
  %206 = vmatprep.mubr.f32.mxu0 0.0
  %207 = vmatmul.mubr.f32.gmra.mrb[0].mxu0 %v29
  %v208 = vpop.f32.mrb[0].mxu0
  %v209 = vadd.f32 0.0, %v208
  %v210 = vpop.f32.mrb[0].mxu0
  %v211 = vadd.f32 0.0, %v210
  %212 = vmatprep.mubr.f32.mxu0 0.0
  %213 = vmatmul.mubr.f32.gmra.mrb[0].mxu0 %v30
  %v214 = vpop.f32.mrb[0].mxu0
  %v215 = vadd.f32 0.0, %v214
  %v216 = vpop.f32.mrb[0].mxu0
  %v217 = vadd.f32 0.0, %v216
  %218 = vmatprep.mubr.f32.mxu0 0.0
  %219 = vmatmul.mubr.f32.gmra.mrb[0].mxu0 %v31
  %v220 = vpop.f32.mrb[0].mxu0
  %v221 = vadd.f32 0.0, %v220
  %v222 = vpop.f32.mrb[0].mxu0
  %v223 = vadd.f32 0.0, %v222
  %224 = vdwg.mxu0
  %225 = vst [vmem:[%s3] sm:$0xff] %v131
  %226 = vst [vmem:[%s3 + $0x8] sm:$0xff] %v137
  %227 = vst [vmem:[%s3 + $0x10] sm:$0xff] %v143
  %228 = vst [vmem:[%s3 + $0x18] sm:$0xff] %v149
  %229 = vst [vmem:[%s3 + $0x20] sm:$0xff] %v155
  %230 = vst [vmem:[%s3 + $0x28] sm:$0xff] %v161
  %231 = vst [vmem:[%s3 + $0x30] sm:$0xff] %v167
  %232 = vst [vmem:[%s3 + $0x38] sm:$0xff] %v173
  %233 = vst [vmem:[%s3 + $0x40] sm:$0xff] %v179
  %234 = vst [vmem:[%s3 + $0x48] sm:$0xff] %v185
  %235 = vst [vmem:[%s3 + $0x50] sm:$0xff] %v191
  %236 = vst [vmem:[%s3 + $0x58] sm:$0xff] %v197
  %237 = vst [vmem:[%s3 + $0x60] sm:$0xff] %v203
  %238 = vst [vmem:[%s3 + $0x68] sm:$0xff] %v209
  %239 = vst [vmem:[%s3 + $0x70] sm:$0xff] %v215
  %240 = vst [vmem:[%s3 + $0x78] sm:$0xff] %v221
  %v241 = vld [vmem:[%s2] sm:$0x1]
  %242 = vmatprep.subr.mxu0 0.0
  %243 = vmatpush1.xpose.msra.mxu0 %v131
  %244 = vmatprep.subr.mxu0 0.0
  %245 = vmatpush1.xpose.msra.mxu0 %v137
  %246 = vmatprep.subr.mxu0 0.0
  %247 = vmatpush1.xpose.msra.mxu0 %v143
  %248 = vmatprep.subr.mxu0 0.0
  %249 = vmatpush1.xpose.msra.mxu0 %v149
  %250 = vmatprep.subr.mxu0 0.0
  %251 = vmatpush1.xpose.msra.mxu0 %v155
  %252 = vmatprep.subr.mxu0 0.0
  %253 = vmatpush1.xpose.msra.mxu0 %v161
  %254 = vmatprep.subr.mxu0 0.0
  %255 = vmatpush1.xpose.msra.mxu0 %v167
  %256 = vmatprep.subr.mxu0 0.0
  %257 = vmatpush1.xpose.msra.mxu0 %v173
  %258 = vmatprep.subr.mxu0 0.0
  %259 = vmatpush1.xpose.msra.mxu0 %v179
  %260 = vmatprep.subr.mxu0 0.0
  %261 = vmatpush1.xpose.msra.mxu0 %v185
  %262 = vmatprep.subr.mxu0 0.0
  %263 = vmatpush1.xpose.msra.mxu0 %v191
  %264 = vmatprep.subr.mxu0 0.0
  %265 = vmatpush1.xpose.msra.mxu0 %v197
  %266 = vmatprep.subr.mxu0 0.0
  %267 = vmatpush1.xpose.msra.mxu0 %v203
  %268 = vmatprep.subr.mxu0 0.0
  %269 = vmatpush1.xpose.msra.mxu0 %v209
  %270 = vmatprep.subr.mxu0 0.0
  %271 = vmatpush1.xpose.msra.mxu0 %v215
  %272 = vmatprep.subr.mxu0 0.0
  %273 = vmatpush1.xpose.msra.mxu0 %v221
  %274 = vmatprep.subr.mxu0 0.0
  %275 = vmatpush1.xpose.msra.mxu0 0.0
  %276 = vmatprep.subr.mxu0 0.0
  %277 = vmatpush1.xpose.msra.mxu0 0.0
  %278 = vmatprep.subr.mxu0 0.0
  %279 = vmatpush1.xpose.msra.mxu0 0.0
  %280 = vmatprep.subr.mxu0 0.0
  %281 = vmatpush1.xpose.msra.mxu0 0.0
  %282 = vmatprep.subr.mxu0 0.0
  %283 = vmatpush1.xpose.msra.mxu0 0.0
  %284 = vmatprep.subr.mxu0 0.0
  %285 = vmatpush1.xpose.msra.mxu0 0.0
  %286 = vmatprep.subr.mxu0 0.0
  %287 = vmatpush1.xpose.msra.mxu0 0.0
  %288 = vmatprep.subr.mxu0 0.0
  %289 = vmatpush1.xpose.msra.mxu0 0.0
  %290 = vmatprep.subr.mxu0 0.0
  %291 = vmatpush1.xpose.msra.mxu0 0.0
  %292 = vmatprep.subr.mxu0 0.0
  %293 = vmatpush1.xpose.msra.mxu0 0.0
  %294 = vmatprep.subr.mxu0 0.0
  %295 = vmatpush1.xpose.msra.mxu0 0.0
  %296 = vmatprep.subr.mxu0 0.0
  %297 = vmatpush1.xpose.msra.mxu0 0.0
  %298 = vmatprep.subr.mxu0 0.0
  %299 = vmatpush1.xpose.msra.mxu0 0.0
  %300 = vmatprep.subr.mxu0 0.0
  %301 = vmatpush1.xpose.msra.mxu0 0.0
  %302 = vmatprep.subr.mxu0 0.0
  %303 = vmatpush1.xpose.msra.mxu0 0.0
  %304 = vmatprep.subr.mxu0 0.0
  %305 = vmatpush1.xpose.msra.mxu0 0.0
  %306 = vmatprep.mubr.f32.mxu0 0.0
  %307 = vmatmul.mubr.f32.gmra.mrb[0].mxu0 %v241
  %v308 = vpop.f32.mrb[0].mxu0
  %v309 = vadd.f32 0.0, %v308
  %v310 = vpop.f32.mrb[0].mxu0
  %311 = vdwg.mxu0
  %s312 = scalar_lea.vmem %s3, 128
  %313 = vst [vmem:[%s312] sm:$0xff] %v133
  %314 = vst [vmem:[%s312 + $0x8] sm:$0xff] %v139
  %315 = vst [vmem:[%s312 + $0x10] sm:$0xff] %v145
  %316 = vst [vmem:[%s312 + $0x18] sm:$0xff] %v151
  %317 = vst [vmem:[%s312 + $0x20] sm:$0xff] %v157
  %318 = vst [vmem:[%s312 + $0x28] sm:$0xff] %v163
  %319 = vst [vmem:[%s312 + $0x30] sm:$0xff] %v169
  %320 = vst [vmem:[%s312 + $0x38] sm:$0xff] %v175
  %321 = vst [vmem:[%s312 + $0x40] sm:$0xff] %v181
  %322 = vst [vmem:[%s312 + $0x48] sm:$0xff] %v187
  %323 = vst [vmem:[%s312 + $0x50] sm:$0xff] %v193
  %324 = vst [vmem:[%s312 + $0x58] sm:$0xff] %v199
  %325 = vst [vmem:[%s312 + $0x60] sm:$0xff] %v205
  %326 = vst [vmem:[%s312 + $0x68] sm:$0xff] %v211
  %327 = vst [vmem:[%s312 + $0x70] sm:$0xff] %v217
  %328 = vst [vmem:[%s312 + $0x78] sm:$0xff] %v223
  %v329 = vld [vmem:[%s2 + $0x1] sm:$0x1]
  %330 = vmatprep.subr.mxu0 0.0
  %331 = vmatpush1.xpose.msra.mxu0 %v133
  %332 = vmatprep.subr.mxu0 0.0
  %333 = vmatpush1.xpose.msra.mxu0 %v139
  %334 = vmatprep.subr.mxu0 0.0
  %335 = vmatpush1.xpose.msra.mxu0 %v145
  %336 = vmatprep.subr.mxu0 0.0
  %337 = vmatpush1.xpose.msra.mxu0 %v151
  %338 = vmatprep.subr.mxu0 0.0
  %339 = vmatpush1.xpose.msra.mxu0 %v157
  %340 = vmatprep.subr.mxu0 0.0
  %341 = vmatpush1.xpose.msra.mxu0 %v163
  %342 = vmatprep.subr.mxu0 0.0
  %343 = vmatpush1.xpose.msra.mxu0 %v169
  %344 = vmatprep.subr.mxu0 0.0
  %345 = vmatpush1.xpose.msra.mxu0 %v175
  %346 = vmatprep.subr.mxu0 0.0
  %347 = vmatpush1.xpose.msra.mxu0 %v181
  %348 = vmatprep.subr.mxu0 0.0
  %349 = vmatpush1.xpose.msra.mxu0 %v187
  %350 = vmatprep.subr.mxu0 0.0
  %351 = vmatpush1.xpose.msra.mxu0 %v193
  %352 = vmatprep.subr.mxu0 0.0
  %353 = vmatpush1.xpose.msra.mxu0 %v199
  %354 = vmatprep.subr.mxu0 0.0
  %355 = vmatpush1.xpose.msra.mxu0 %v205
  %356 = vmatprep.subr.mxu0 0.0
  %357 = vmatpush1.xpose.msra.mxu0 %v211
  %358 = vmatprep.subr.mxu0 0.0
  %359 = vmatpush1.xpose.msra.mxu0 %v217
  %360 = vmatprep.subr.mxu0 0.0
  %361 = vmatpush1.xpose.msra.mxu0 %v223
  %362 = vmatprep.subr.mxu0 0.0
  %363 = vmatpush1.xpose.msra.mxu0 0.0
  %364 = vmatprep.subr.mxu0 0.0
  %365 = vmatpush1.xpose.msra.mxu0 0.0
  %366 = vmatprep.subr.mxu0 0.0
  %367 = vmatpush1.xpose.msra.mxu0 0.0
  %368 = vmatprep.subr.mxu0 0.0
  %369 = vmatpush1.xpose.msra.mxu0 0.0
  %370 = vmatprep.subr.mxu0 0.0
  %371 = vmatpush1.xpose.msra.mxu0 0.0
  %372 = vmatprep.subr.mxu0 0.0
  %373 = vmatpush1.xpose.msra.mxu0 0.0
  %374 = vmatprep.subr.mxu0 0.0
  %375 = vmatpush1.xpose.msra.mxu0 0.0
  %376 = vmatprep.subr.mxu0 0.0
  %377 = vmatpush1.xpose.msra.mxu0 0.0
  %378 = vmatprep.subr.mxu0 0.0
  %379 = vmatpush1.xpose.msra.mxu0 0.0
  %380 = vmatprep.subr.mxu0 0.0
  %381 = vmatpush1.xpose.msra.mxu0 0.0
  %382 = vmatprep.subr.mxu0 0.0
  %383 = vmatpush1.xpose.msra.mxu0 0.0
  %384 = vmatprep.subr.mxu0 0.0
  %385 = vmatpush1.xpose.msra.mxu0 0.0
  %386 = vmatprep.subr.mxu0 0.0
  %387 = vmatpush1.xpose.msra.mxu0 0.0
  %388 = vmatprep.subr.mxu0 0.0
  %389 = vmatpush1.xpose.msra.mxu0 0.0
  %390 = vmatprep.subr.mxu0 0.0
  %391 = vmatpush1.xpose.msra.mxu0 0.0
  %392 = vmatprep.subr.mxu0 0.0
  %393 = vmatpush1.xpose.msra.mxu0 0.0
  %394 = vmatprep.mubr.f32.mxu0 0.0
  %395 = vmatmul.mubr.f32.gmra.mrb[0].mxu0 %v329
  %v396 = vpop.f32.mrb[0].mxu0
  %v397 = vadd.f32 0.0, %v396
  %v398 = vpop.f32.mrb[0].mxu0
  %399 = vdwg.mxu0
  %v401 = vrot.slane %v397, 7
  %vm403 = vcmask 1040384
  %v404 = vsel %vm403, %v309, %v401
  %405 = vst [vmem:[%s4] sm:$0x3] %v404
  // Predicated region
  $region14: #{gat_forward.4} parent=0 // pred_check
    _
  $region15: #{gat_forward.4} parent=0 // pred_check_branch
    %407 = sbr.rel (0) target = $region17
  $region16: #{gat_forward.4} parent=0 // pred_region
    _
  $region17: #{gat_forward.4} parent=0 // pred_fallthru
    _
  // Predicated region
  $region18: #{gat_forward.4} parent=0 // pred_check
    _
  $region19: #{gat_forward.4} parent=0 // pred_check_branch
    %409 = sbr.rel (0) target = $region21
  $region20: #{gat_forward.4} parent=0 // pred_region
    _
  $region21: #{gat_forward.4} parent=0 // pred_fallthru
    _
  // Predicated region
  $region22: #{gat_forward.4} parent=0 // pred_check
    _
  $region23: #{gat_forward.4} parent=0 // pred_check_branch
    %411 = sbr.rel (0) target = $region25
  $region24: #{gat_forward.4} parent=0 // pred_region
    _
  $region25: #{gat_forward.4} parent=0 // pred_fallthru
    _
  // Predicated region
  $region26: #{gat_forward.4} parent=0 // pred_check
    _
  $region27: #{gat_forward.4} parent=0 // pred_check_branch
    %413 = sbr.rel (0) target = $region29
  $region28: #{gat_forward.4} parent=0 // pred_region
    _
  $region29: #{gat_forward.4} parent=0 // pred_fallthru
    _

// kernel: gat_forward.5
$region0: #{gat_forward.5}
  #allocation0 [shape = 'u32[]', space=smem, size = 0x4, offset = 0x4, fixed_abs, tag = 'smem constant byte address 0x4 - core index']
  #allocation1 [shape = 'u32[144,128]{1,0:T(1,128)}', space=vmem, size = 0x12000, scoped, tag = 'internal scratch']
  %s0 = inlined_call_operand.vmem [shape: f32[2,128,128], index: 0, kind: input, shape index: {}]
  %s1 = inlined_call_operand.vmem [shape: f32[2,128], index: 1, kind: input, shape index: {}]
  %s2 = inlined_call_operand.vmem [shape: f32[2,128], index: 2, kind: input, shape index: {}]
  %s3 = inlined_call_operand.vmem [shape: f32[1,128], index: 3, kind: input, shape index: {}]
  %s4 = inlined_call_operand.vmem [shape: s8[128,128], index: 4, kind: input, shape index: {}]
  %s5 = inlined_call_operand.vmem [shape: f32[128,128], index: 5, kind: output, shape index: {}]
  %s6 = sld [smem:[#allocation0]]
  $region30: #{gat_forward.5} parent=0
    _
  %s8 = ssub.s32 1, %s6
  %s9 = scalar_select 0, %s8, %s6
  // Predicated region
  $region2: #{gat_forward.5} parent=0 // pred_check
    _
  $region3: #{gat_forward.5} parent=0 // pred_check_branch
    %11 = sbr.rel (0) target = $region5
  $region4: #{gat_forward.5} parent=0 // pred_region
    _
  $region5: #{gat_forward.5} parent=0 // pred_fallthru
    _
  // Predicated region
  $region6: #{gat_forward.5} parent=0 // pred_check
    _
  $region7: #{gat_forward.5} parent=0 // pred_check_branch
    %13 = sbr.rel (0) target = $region9
  $region8: #{gat_forward.5} parent=0 // pred_region
    _
  $region9: #{gat_forward.5} parent=0 // pred_fallthru
    _
  // Predicated region
  $region10: #{gat_forward.5} parent=0 // pred_check
    _
  $region11: #{gat_forward.5} parent=0 // pred_check_branch
    %15 = sbr.rel (0) target = $region13
  $region12: #{gat_forward.5} parent=0 // pred_region
    _
  $region13: #{gat_forward.5} parent=0 // pred_fallthru
    _
  // Predicated region
  $region14: #{gat_forward.5} parent=0 // pred_check
    _
  $region15: #{gat_forward.5} parent=0 // pred_check_branch
    %17 = sbr.rel (0) target = $region17
  $region16: #{gat_forward.5} parent=0 // pred_region
    _
  $region17: #{gat_forward.5} parent=0 // pred_fallthru
    _
  // Predicated region
  $region18: #{gat_forward.5} parent=0 // pred_check
    _
  $region19: #{gat_forward.5} parent=0 // pred_check_branch
    %19 = sbr.rel (0) target = $region21
  $region20: #{gat_forward.5} parent=0 // pred_region
    _
  $region21: #{gat_forward.5} parent=0 // pred_fallthru
    _
  %s20 = smul.u32 0, 128
  %v21 = vld [vmem:[%s4] sm:$0xff]
  %v22 = vld [vmem:[%s4 + $0x8] sm:$0xff]
  %v23 = vld [vmem:[%s4 + $0x10] sm:$0xff]
  %v24 = vld [vmem:[%s4 + $0x18] sm:$0xff]
  %v25 = vunpack.c.0.s8 %v21
  %v26 = vunpack.c.1.s8 %v21
  %v27 = vunpack.c.2.s8 %v21
  %v28 = vunpack.c.3.s8 %v21
  %v29 = vunpack.c.0.s8 %v22
  %v30 = vunpack.c.1.s8 %v22
  %v31 = vunpack.c.2.s8 %v22
  %v32 = vunpack.c.3.s8 %v22
  %v33 = vunpack.c.0.s8 %v23
  %v34 = vunpack.c.1.s8 %v23
  %v35 = vunpack.c.2.s8 %v23
  %v36 = vunpack.c.3.s8 %v23
  %v37 = vunpack.c.0.s8 %v24
  %v38 = vunpack.c.1.s8 %v24
  %v39 = vunpack.c.2.s8 %v24
  %v40 = vunpack.c.3.s8 %v24
  %v41 = vcvt.s32.f32 %v25
  %v42 = vcvt.s32.f32 %v26
  %v43 = vcvt.s32.f32 %v27
  %v44 = vcvt.s32.f32 %v28
  %v45 = vcvt.s32.f32 %v29
  %v46 = vcvt.s32.f32 %v30
  %v47 = vcvt.s32.f32 %v31
  %v48 = vcvt.s32.f32 %v32
  %v49 = vcvt.s32.f32 %v33
  %v50 = vcvt.s32.f32 %v34
  %v51 = vcvt.s32.f32 %v35
  %v52 = vcvt.s32.f32 %v36
  %v53 = vcvt.s32.f32 %v37
  %v54 = vcvt.s32.f32 %v38
  %v55 = vcvt.s32.f32 %v39
  %v56 = vcvt.s32.f32 %v40
  %v57 = vsub.f32 %v41, 1.0
  %v58 = vsub.f32 %v42, 1.0
  %v59 = vsub.f32 %v43, 1.0
  %v60 = vsub.f32 %v44, 1.0
  %v61 = vsub.f32 %v45, 1.0
  %v62 = vsub.f32 %v46, 1.0
  %v63 = vsub.f32 %v47, 1.0
  %v64 = vsub.f32 %v48, 1.0
  %v65 = vsub.f32 %v49, 1.0
  %v66 = vsub.f32 %v50, 1.0
  %v67 = vsub.f32 %v51, 1.0
  %v68 = vsub.f32 %v52, 1.0
  %v69 = vsub.f32 %v53, 1.0
  %v70 = vsub.f32 %v54, 1.0
  %v71 = vsub.f32 %v55, 1.0
  %v72 = vsub.f32 %v56, 1.0
  %v73 = vmul.f32 %v57, 1e+30
  %v74 = vmul.f32 %v58, 1e+30
  %v75 = vmul.f32 %v59, 1e+30
  %v76 = vmul.f32 %v60, 1e+30
  %v77 = vmul.f32 %v61, 1e+30
  %v78 = vmul.f32 %v62, 1e+30
  %v79 = vmul.f32 %v63, 1e+30
  %v80 = vmul.f32 %v64, 1e+30
  %v81 = vmul.f32 %v65, 1e+30
  %v82 = vmul.f32 %v66, 1e+30
  %v83 = vmul.f32 %v67, 1e+30
  %v84 = vmul.f32 %v68, 1e+30
  %v85 = vmul.f32 %v69, 1e+30
  %v86 = vmul.f32 %v70, 1e+30
  %v87 = vmul.f32 %v71, 1e+30
  %v88 = vmul.f32 %v72, 1e+30
  %v89 = vld [vmem:[%s0] sm:$0xff]
  %v90 = vld [vmem:[%s0 + $0x8] sm:$0xff]
  %v91 = vld [vmem:[%s0 + $0x10] sm:$0xff]
  %v92 = vld [vmem:[%s0 + $0x18] sm:$0xff]
  %v93 = vld [vmem:[%s0 + $0x20] sm:$0xff]
  %v94 = vld [vmem:[%s0 + $0x28] sm:$0xff]
  %v95 = vld [vmem:[%s0 + $0x30] sm:$0xff]
  %v96 = vld [vmem:[%s0 + $0x38] sm:$0xff]
  %v97 = vld [vmem:[%s0 + $0x40] sm:$0xff]
  %v98 = vld [vmem:[%s0 + $0x48] sm:$0xff]
  %v99 = vld [vmem:[%s0 + $0x50] sm:$0xff]
  %v100 = vld [vmem:[%s0 + $0x58] sm:$0xff]
  %v101 = vld [vmem:[%s0 + $0x60] sm:$0xff]
  %v102 = vld [vmem:[%s0 + $0x68] sm:$0xff]
  %v103 = vld [vmem:[%s0 + $0x70] sm:$0xff]
  %v104 = vld [vmem:[%s0 + $0x78] sm:$0xff]
  %s105 = scalar_lea.vmem %s0, %s20
  %v106 = vld [vmem:[%s105] sm:$0xff]
  %v107 = vld [vmem:[%s105 + $0x8] sm:$0xff]
  %v108 = vld [vmem:[%s105 + $0x10] sm:$0xff]
  %v109 = vld [vmem:[%s105 + $0x18] sm:$0xff]
  %v110 = vld [vmem:[%s105 + $0x20] sm:$0xff]
  %v111 = vld [vmem:[%s105 + $0x28] sm:$0xff]
  %v112 = vld [vmem:[%s105 + $0x30] sm:$0xff]
  %v113 = vld [vmem:[%s105 + $0x38] sm:$0xff]
  %v114 = vld [vmem:[%s105 + $0x40] sm:$0xff]
  %v115 = vld [vmem:[%s105 + $0x48] sm:$0xff]
  %v116 = vld [vmem:[%s105 + $0x50] sm:$0xff]
  %v117 = vld [vmem:[%s105 + $0x58] sm:$0xff]
  %v118 = vld [vmem:[%s105 + $0x60] sm:$0xff]
  %v119 = vld [vmem:[%s105 + $0x68] sm:$0xff]
  %v120 = vld [vmem:[%s105 + $0x70] sm:$0xff]
  %v121 = vld [vmem:[%s105 + $0x78] sm:$0xff]
  %v122 = vld [vmem:[%s2] sm:$0x1]
  %v123 = vlaneseq
  %v124 = vshrl.u32 %v123, 7
  %v125 = vsub.s32 0, %v124
  %v126 = vrot.slane %v122, %v125
  %v127 = vmul.f32 %v106, %v126
  %v128 = vmul.f32 %v107, %v126
  %v129 = vmul.f32 %v108, %v126
  %v130 = vmul.f32 %v109, %v126
  %v131 = vmul.f32 %v110, %v126
  %v132 = vmul.f32 %v111, %v126
  %v133 = vmul.f32 %v112, %v126
  %v134 = vmul.f32 %v113, %v126
  %v135 = vmul.f32 %v114, %v126
  %v136 = vmul.f32 %v115, %v126
  %v137 = vmul.f32 %v116, %v126
  %v138 = vmul.f32 %v117, %v126
  %v139 = vmul.f32 %v118, %v126
  %v140 = vmul.f32 %v119, %v126
  %v141 = vmul.f32 %v120, %v126
  %v142 = vmul.f32 %v121, %v126
  %143 = vadd.xlane.f32.xlu0 %v127
  %v144 = vpop.xlane.xlu0 %143
  %145 = vadd.xlane.f32.xlu0 %v128
  %v146 = vpop.xlane.xlu0 %145
  %147 = vadd.xlane.f32.xlu0 %v129
  %v148 = vpop.xlane.xlu0 %147
  %149 = vadd.xlane.f32.xlu0 %v130
  %v150 = vpop.xlane.xlu0 %149
  %151 = vadd.xlane.f32.xlu0 %v131
  %v152 = vpop.xlane.xlu0 %151
  %153 = vadd.xlane.f32.xlu0 %v132
  %v154 = vpop.xlane.xlu0 %153
  %155 = vadd.xlane.f32.xlu0 %v133
  %v156 = vpop.xlane.xlu0 %155
  %157 = vadd.xlane.f32.xlu0 %v134
  %v158 = vpop.xlane.xlu0 %157
  %159 = vadd.xlane.f32.xlu0 %v135
  %v160 = vpop.xlane.xlu0 %159
  %161 = vadd.xlane.f32.xlu0 %v136
  %v162 = vpop.xlane.xlu0 %161
  %163 = vadd.xlane.f32.xlu0 %v137
  %v164 = vpop.xlane.xlu0 %163
  %165 = vadd.xlane.f32.xlu0 %v138
  %v166 = vpop.xlane.xlu0 %165
  %167 = vadd.xlane.f32.xlu0 %v139
  %v168 = vpop.xlane.xlu0 %167
  %169 = vadd.xlane.f32.xlu0 %v140
  %v170 = vpop.xlane.xlu0 %169
  %171 = vadd.xlane.f32.xlu0 %v141
  %v172 = vpop.xlane.xlu0 %171
  %173 = vadd.xlane.f32.xlu0 %v142
  %v174 = vpop.xlane.xlu0 %173
  %v175 = vld [vmem:[%s1] sm:$0x1]
  %v176 = vlaneseq
  %v177 = vshrl.u32 %v176, 7
  %v178 = vsub.s32 0, %v177
  %v179 = vrot.slane %v175, %v178
  %v180 = vadd.f32 %v144, %v179
  %v181 = vadd.f32 %v146, %v179
  %v182 = vadd.f32 %v148, %v179
  %v183 = vadd.f32 %v150, %v179
  %v184 = vadd.f32 %v152, %v179
  %v185 = vadd.f32 %v154, %v179
  %v186 = vadd.f32 %v156, %v179
  %v187 = vadd.f32 %v158, %v179
  %v188 = vadd.f32 %v160, %v179
  %v189 = vadd.f32 %v162, %v179
  %v190 = vadd.f32 %v164, %v179
  %v191 = vadd.f32 %v166, %v179
  %v192 = vadd.f32 %v168, %v179
  %v193 = vadd.f32 %v170, %v179
  %v194 = vadd.f32 %v172, %v179
  %v195 = vadd.f32 %v174, %v179
  %vm196 = vcmp.gt.f32.partialorder %v180, 0.0
  %vm197 = vcmp.gt.f32.partialorder %v181, 0.0
  %vm198 = vcmp.gt.f32.partialorder %v182, 0.0
  %vm199 = vcmp.gt.f32.partialorder %v183, 0.0
  %vm200 = vcmp.gt.f32.partialorder %v184, 0.0
  %vm201 = vcmp.gt.f32.partialorder %v185, 0.0
  %vm202 = vcmp.gt.f32.partialorder %v186, 0.0
  %vm203 = vcmp.gt.f32.partialorder %v187, 0.0
  %vm204 = vcmp.gt.f32.partialorder %v188, 0.0
  %vm205 = vcmp.gt.f32.partialorder %v189, 0.0
  %vm206 = vcmp.gt.f32.partialorder %v190, 0.0
  %vm207 = vcmp.gt.f32.partialorder %v191, 0.0
  %vm208 = vcmp.gt.f32.partialorder %v192, 0.0
  %vm209 = vcmp.gt.f32.partialorder %v193, 0.0
  %vm210 = vcmp.gt.f32.partialorder %v194, 0.0
  %vm211 = vcmp.gt.f32.partialorder %v195, 0.0
  %v212 = vmul.f32 %v180, 0.2
  %v213 = vmul.f32 %v181, 0.2
  %v214 = vmul.f32 %v182, 0.2
  %v215 = vmul.f32 %v183, 0.2
  %v216 = vmul.f32 %v184, 0.2
  %v217 = vmul.f32 %v185, 0.2
  %v218 = vmul.f32 %v186, 0.2
  %v219 = vmul.f32 %v187, 0.2
  %v220 = vmul.f32 %v188, 0.2
  %v221 = vmul.f32 %v189, 0.2
  %v222 = vmul.f32 %v190, 0.2
  %v223 = vmul.f32 %v191, 0.2
  %v224 = vmul.f32 %v192, 0.2
  %v225 = vmul.f32 %v193, 0.2
  %v226 = vmul.f32 %v194, 0.2
  %v227 = vmul.f32 %v195, 0.2
  %v228 = vsel %vm196, %v180, %v212
  %v229 = vsel %vm197, %v181, %v213
  %v230 = vsel %vm198, %v182, %v214
  %v231 = vsel %vm199, %v183, %v215
  %v232 = vsel %vm200, %v184, %v216
  %v233 = vsel %vm201, %v185, %v217
  %v234 = vsel %vm202, %v186, %v218
  %v235 = vsel %vm203, %v187, %v219
  %v236 = vsel %vm204, %v188, %v220
  %v237 = vsel %vm205, %v189, %v221
  %v238 = vsel %vm206, %v190, %v222
  %v239 = vsel %vm207, %v191, %v223
  %v240 = vsel %vm208, %v192, %v224
  %v241 = vsel %vm209, %v193, %v225
  %v242 = vsel %vm210, %v194, %v226
  %v243 = vsel %vm211, %v195, %v227
  %v244 = vadd.f32 %v228, %v73
  %v245 = vadd.f32 %v229, %v74
  %v246 = vadd.f32 %v230, %v75
  %v247 = vadd.f32 %v231, %v76
  %v248 = vadd.f32 %v232, %v77
  %v249 = vadd.f32 %v233, %v78
  %v250 = vadd.f32 %v234, %v79
  %v251 = vadd.f32 %v235, %v80
  %v252 = vadd.f32 %v236, %v81
  %v253 = vadd.f32 %v237, %v82
  %v254 = vadd.f32 %v238, %v83
  %v255 = vadd.f32 %v239, %v84
  %v256 = vadd.f32 %v240, %v85
  %v257 = vadd.f32 %v241, %v86
  %v258 = vadd.f32 %v242, %v87
  %v259 = vadd.f32 %v243, %v88
  %260 = vmax.xlane.f32.xlu0 %v244
  %v261 = vpop.xlane.xlu0 %260
  %262 = vmax.xlane.f32.xlu0 %v245
  %v263 = vpop.xlane.xlu0 %262
  %264 = vmax.xlane.f32.xlu0 %v246
  %v265 = vpop.xlane.xlu0 %264
  %266 = vmax.xlane.f32.xlu0 %v247
  %v267 = vpop.xlane.xlu0 %266
  %268 = vmax.xlane.f32.xlu0 %v248
  %v269 = vpop.xlane.xlu0 %268
  %270 = vmax.xlane.f32.xlu0 %v249
  %v271 = vpop.xlane.xlu0 %270
  %272 = vmax.xlane.f32.xlu0 %v250
  %v273 = vpop.xlane.xlu0 %272
  %274 = vmax.xlane.f32.xlu0 %v251
  %v275 = vpop.xlane.xlu0 %274
  %276 = vmax.xlane.f32.xlu0 %v252
  %v277 = vpop.xlane.xlu0 %276
  %278 = vmax.xlane.f32.xlu0 %v253
  %v279 = vpop.xlane.xlu0 %278
  %280 = vmax.xlane.f32.xlu0 %v254
  %v281 = vpop.xlane.xlu0 %280
  %282 = vmax.xlane.f32.xlu0 %v255
  %v283 = vpop.xlane.xlu0 %282
  %284 = vmax.xlane.f32.xlu0 %v256
  %v285 = vpop.xlane.xlu0 %284
  %286 = vmax.xlane.f32.xlu0 %v257
  %v287 = vpop.xlane.xlu0 %286
  %288 = vmax.xlane.f32.xlu0 %v258
  %v289 = vpop.xlane.xlu0 %288
  %290 = vmax.xlane.f32.xlu0 %v259
  %v291 = vpop.xlane.xlu0 %290
  %v292 = vsub.f32 %v244, %v261
  %v293 = vsub.f32 %v245, %v263
  %v294 = vsub.f32 %v246, %v265
  %v295 = vsub.f32 %v247, %v267
  %v296 = vsub.f32 %v248, %v269
  %v297 = vsub.f32 %v249, %v271
  %v298 = vsub.f32 %v250, %v273
  %v299 = vsub.f32 %v251, %v275
  %v300 = vsub.f32 %v252, %v277
  %v301 = vsub.f32 %v253, %v279
  %v302 = vsub.f32 %v254, %v281
  %v303 = vsub.f32 %v255, %v283
  %v304 = vsub.f32 %v256, %v285
  %v305 = vsub.f32 %v257, %v287
  %v306 = vsub.f32 %v258, %v289
  %v307 = vsub.f32 %v259, %v291
  %v308 = vmul.f32 %v292, 1.442695
  %v309 = vpow.pop %v308
  %v310 = vmul.f32 %v293, 1.442695
  %v311 = vpow.pop %v310
  %v312 = vmul.f32 %v294, 1.442695
  %v313 = vpow.pop %v312
  %v314 = vmul.f32 %v295, 1.442695
  %v315 = vpow.pop %v314
  %v316 = vmul.f32 %v296, 1.442695
  %v317 = vpow.pop %v316
  %v318 = vmul.f32 %v297, 1.442695
  %v319 = vpow.pop %v318
  %v320 = vmul.f32 %v298, 1.442695
  %v321 = vpow.pop %v320
  %v322 = vmul.f32 %v299, 1.442695
  %v323 = vpow.pop %v322
  %v324 = vmul.f32 %v300, 1.442695
  %v325 = vpow.pop %v324
  %v326 = vmul.f32 %v301, 1.442695
  %v327 = vpow.pop %v326
  %v328 = vmul.f32 %v302, 1.442695
  %v329 = vpow.pop %v328
  %v330 = vmul.f32 %v303, 1.442695
  %v331 = vpow.pop %v330
  %v332 = vmul.f32 %v304, 1.442695
  %v333 = vpow.pop %v332
  %v334 = vmul.f32 %v305, 1.442695
  %v335 = vpow.pop %v334
  %v336 = vmul.f32 %v306, 1.442695
  %v337 = vpow.pop %v336
  %v338 = vmul.f32 %v307, 1.442695
  %v339 = vpow.pop %v338
  %340 = vadd.xlane.f32.xlu0 %v309
  %v341 = vpop.xlane.xlu0 %340
  %342 = vadd.xlane.f32.xlu0 %v311
  %v343 = vpop.xlane.xlu0 %342
  %344 = vadd.xlane.f32.xlu0 %v313
  %v345 = vpop.xlane.xlu0 %344
  %346 = vadd.xlane.f32.xlu0 %v315
  %v347 = vpop.xlane.xlu0 %346
  %348 = vadd.xlane.f32.xlu0 %v317
  %v349 = vpop.xlane.xlu0 %348
  %350 = vadd.xlane.f32.xlu0 %v319
  %v351 = vpop.xlane.xlu0 %350
  %352 = vadd.xlane.f32.xlu0 %v321
  %v353 = vpop.xlane.xlu0 %352
  %354 = vadd.xlane.f32.xlu0 %v323
  %v355 = vpop.xlane.xlu0 %354
  %356 = vadd.xlane.f32.xlu0 %v325
  %v357 = vpop.xlane.xlu0 %356
  %358 = vadd.xlane.f32.xlu0 %v327
  %v359 = vpop.xlane.xlu0 %358
  %360 = vadd.xlane.f32.xlu0 %v329
  %v361 = vpop.xlane.xlu0 %360
  %362 = vadd.xlane.f32.xlu0 %v331
  %v363 = vpop.xlane.xlu0 %362
  %364 = vadd.xlane.f32.xlu0 %v333
  %v365 = vpop.xlane.xlu0 %364
  %366 = vadd.xlane.f32.xlu0 %v335
  %v367 = vpop.xlane.xlu0 %366
  %368 = vadd.xlane.f32.xlu0 %v337
  %v369 = vpop.xlane.xlu0 %368
  %370 = vadd.xlane.f32.xlu0 %v339
  %v371 = vpop.xlane.xlu0 %370
  %372 = vmatprep.subr.mxu0 0.0
  %373 = vmatpush1.msra.mxu0 %v89
  %374 = vmatprep.subr.mxu0 0.0
  %375 = vmatpush1.msra.mxu0 %v90
  %376 = vmatprep.subr.mxu0 0.0
  %377 = vmatpush1.msra.mxu0 %v91
  %378 = vmatprep.subr.mxu0 0.0
  %379 = vmatpush1.msra.mxu0 %v92
  %380 = vmatprep.subr.mxu0 0.0
  %381 = vmatpush1.msra.mxu0 %v93
  %382 = vmatprep.subr.mxu0 0.0
  %383 = vmatpush1.msra.mxu0 %v94
  %384 = vmatprep.subr.mxu0 0.0
  %385 = vmatpush1.msra.mxu0 %v95
  %386 = vmatprep.subr.mxu0 0.0
  %387 = vmatpush1.msra.mxu0 %v96
  %388 = vmatprep.subr.mxu0 0.0
  %389 = vmatpush1.msra.mxu0 %v97
  %390 = vmatprep.subr.mxu0 0.0
  %391 = vmatpush1.msra.mxu0 %v98
  %392 = vmatprep.subr.mxu0 0.0
  %393 = vmatpush1.msra.mxu0 %v99
  %394 = vmatprep.subr.mxu0 0.0
  %395 = vmatpush1.msra.mxu0 %v100
  %396 = vmatprep.subr.mxu0 0.0
  %397 = vmatpush1.msra.mxu0 %v101
  %398 = vmatprep.subr.mxu0 0.0
  %399 = vmatpush1.msra.mxu0 %v102
  %400 = vmatprep.subr.mxu0 0.0
  %401 = vmatpush1.msra.mxu0 %v103
  %402 = vmatprep.subr.mxu0 0.0
  %403 = vmatpush1.msra.mxu0 %v104
  %404 = vmatprep.subr.mxu0 0.0
  %405 = vmatpush1.msra.mxu0 0.0
  %406 = vmatprep.subr.mxu0 0.0
  %407 = vmatpush1.msra.mxu0 0.0
  %408 = vmatprep.subr.mxu0 0.0
  %409 = vmatpush1.msra.mxu0 0.0
  %410 = vmatprep.subr.mxu0 0.0
  %411 = vmatpush1.msra.mxu0 0.0
  %412 = vmatprep.subr.mxu0 0.0
  %413 = vmatpush1.msra.mxu0 0.0
  %414 = vmatprep.subr.mxu0 0.0
  %415 = vmatpush1.msra.mxu0 0.0
  %416 = vmatprep.subr.mxu0 0.0
  %417 = vmatpush1.msra.mxu0 0.0
  %418 = vmatprep.subr.mxu0 0.0
  %419 = vmatpush1.msra.mxu0 0.0
  %420 = vmatprep.subr.mxu0 0.0
  %421 = vmatpush1.msra.mxu0 0.0
  %422 = vmatprep.subr.mxu0 0.0
  %423 = vmatpush1.msra.mxu0 0.0
  %424 = vmatprep.subr.mxu0 0.0
  %425 = vmatpush1.msra.mxu0 0.0
  %426 = vmatprep.subr.mxu0 0.0
  %427 = vmatpush1.msra.mxu0 0.0
  %428 = vmatprep.subr.mxu0 0.0
  %429 = vmatpush1.msra.mxu0 0.0
  %430 = vmatprep.subr.mxu0 0.0
  %431 = vmatpush1.msra.mxu0 0.0
  %432 = vmatprep.subr.mxu0 0.0
  %433 = vmatpush1.msra.mxu0 0.0
  %434 = vmatprep.subr.mxu0 0.0
  %435 = vmatpush1.msra.mxu0 0.0
  %436 = vmatprep.mubr.f32.mxu0 0.0
  %437 = vmatmul.mubr.f32.gmra.mrb[0].mxu0 %v309
  %v438 = vpop.f32.mrb[0].mxu0
  %v439 = vadd.f32 0.0, %v438
  %v440 = vpop.f32.mrb[0].mxu0
  %441 = vmatprep.mubr.f32.mxu0 0.0
  %442 = vmatmul.mubr.f32.gmra.mrb[0].mxu0 %v311
  %v443 = vpop.f32.mrb[0].mxu0
  %v444 = vadd.f32 0.0, %v443
  %v445 = vpop.f32.mrb[0].mxu0
  %446 = vmatprep.mubr.f32.mxu0 0.0
  %447 = vmatmul.mubr.f32.gmra.mrb[0].mxu0 %v313
  %v448 = vpop.f32.mrb[0].mxu0
  %v449 = vadd.f32 0.0, %v448
  %v450 = vpop.f32.mrb[0].mxu0
  %451 = vmatprep.mubr.f32.mxu0 0.0
  %452 = vmatmul.mubr.f32.gmra.mrb[0].mxu0 %v315
  %v453 = vpop.f32.mrb[0].mxu0
  %v454 = vadd.f32 0.0, %v453
  %v455 = vpop.f32.mrb[0].mxu0
  %456 = vmatprep.mubr.f32.mxu0 0.0
  %457 = vmatmul.mubr.f32.gmra.mrb[0].mxu0 %v317
  %v458 = vpop.f32.mrb[0].mxu0
  %v459 = vadd.f32 0.0, %v458
  %v460 = vpop.f32.mrb[0].mxu0
  %461 = vmatprep.mubr.f32.mxu0 0.0
  %462 = vmatmul.mubr.f32.gmra.mrb[0].mxu0 %v319
  %v463 = vpop.f32.mrb[0].mxu0
  %v464 = vadd.f32 0.0, %v463
  %v465 = vpop.f32.mrb[0].mxu0
  %466 = vmatprep.mubr.f32.mxu0 0.0
  %467 = vmatmul.mubr.f32.gmra.mrb[0].mxu0 %v321
  %v468 = vpop.f32.mrb[0].mxu0
  %v469 = vadd.f32 0.0, %v468
  %v470 = vpop.f32.mrb[0].mxu0
  %471 = vmatprep.mubr.f32.mxu0 0.0
  %472 = vmatmul.mubr.f32.gmra.mrb[0].mxu0 %v323
  %v473 = vpop.f32.mrb[0].mxu0
  %v474 = vadd.f32 0.0, %v473
  %v475 = vpop.f32.mrb[0].mxu0
  %476 = vmatprep.mubr.f32.mxu0 0.0
  %477 = vmatmul.mubr.f32.gmra.mrb[0].mxu0 %v325
  %v478 = vpop.f32.mrb[0].mxu0
  %v479 = vadd.f32 0.0, %v478
  %v480 = vpop.f32.mrb[0].mxu0
  %481 = vmatprep.mubr.f32.mxu0 0.0
  %482 = vmatmul.mubr.f32.gmra.mrb[0].mxu0 %v327
  %v483 = vpop.f32.mrb[0].mxu0
  %v484 = vadd.f32 0.0, %v483
  %v485 = vpop.f32.mrb[0].mxu0
  %486 = vmatprep.mubr.f32.mxu0 0.0
  %487 = vmatmul.mubr.f32.gmra.mrb[0].mxu0 %v329
  %v488 = vpop.f32.mrb[0].mxu0
  %v489 = vadd.f32 0.0, %v488
  %v490 = vpop.f32.mrb[0].mxu0
  %491 = vmatprep.mubr.f32.mxu0 0.0
  %492 = vmatmul.mubr.f32.gmra.mrb[0].mxu0 %v331
  %v493 = vpop.f32.mrb[0].mxu0
  %v494 = vadd.f32 0.0, %v493
  %v495 = vpop.f32.mrb[0].mxu0
  %496 = vmatprep.mubr.f32.mxu0 0.0
  %497 = vmatmul.mubr.f32.gmra.mrb[0].mxu0 %v333
  %v498 = vpop.f32.mrb[0].mxu0
  %v499 = vadd.f32 0.0, %v498
  %v500 = vpop.f32.mrb[0].mxu0
  %501 = vmatprep.mubr.f32.mxu0 0.0
  %502 = vmatmul.mubr.f32.gmra.mrb[0].mxu0 %v335
  %v503 = vpop.f32.mrb[0].mxu0
  %v504 = vadd.f32 0.0, %v503
  %v505 = vpop.f32.mrb[0].mxu0
  %506 = vmatprep.mubr.f32.mxu0 0.0
  %507 = vmatmul.mubr.f32.gmra.mrb[0].mxu0 %v337
  %v508 = vpop.f32.mrb[0].mxu0
  %v509 = vadd.f32 0.0, %v508
  %v510 = vpop.f32.mrb[0].mxu0
  %511 = vmatprep.mubr.f32.mxu0 0.0
  %512 = vmatmul.mubr.f32.gmra.mrb[0].mxu0 %v339
  %v513 = vpop.f32.mrb[0].mxu0
  %v514 = vadd.f32 0.0, %v513
  %v515 = vpop.f32.mrb[0].mxu0
  %516 = vdwg.mxu0
  %v517 = vrcp.pop %v341
  %v518 = vrcp.pop %v343
  %v519 = vrcp.pop %v345
  %v520 = vrcp.pop %v347
  %v521 = vrcp.pop %v349
  %v522 = vrcp.pop %v351
  %v523 = vrcp.pop %v353
  %v524 = vrcp.pop %v355
  %v525 = vrcp.pop %v357
  %v526 = vrcp.pop %v359
  %v527 = vrcp.pop %v361
  %v528 = vrcp.pop %v363
  %v529 = vrcp.pop %v365
  %v530 = vrcp.pop %v367
  %v531 = vrcp.pop %v369
  %v532 = vrcp.pop %v371
  %v533 = vmul.f32 %v439, %v517
  %v534 = vmul.f32 %v444, %v518
  %v535 = vmul.f32 %v449, %v519
  %v536 = vmul.f32 %v454, %v520
  %v537 = vmul.f32 %v459, %v521
  %v538 = vmul.f32 %v464, %v522
  %v539 = vmul.f32 %v469, %v523
  %v540 = vmul.f32 %v474, %v524
  %v541 = vmul.f32 %v479, %v525
  %v542 = vmul.f32 %v484, %v526
  %v543 = vmul.f32 %v489, %v527
  %v544 = vmul.f32 %v494, %v528
  %v545 = vmul.f32 %v499, %v529
  %v546 = vmul.f32 %v504, %v530
  %v547 = vmul.f32 %v509, %v531
  %v548 = vmul.f32 %v514, %v532
  %v549 = vadd.f32 %v533, 0.0
  %v550 = vadd.f32 %v534, 0.0
  %v551 = vadd.f32 %v535, 0.0
  %v552 = vadd.f32 %v536, 0.0
  %v553 = vadd.f32 %v537, 0.0
  %v554 = vadd.f32 %v538, 0.0
  %v555 = vadd.f32 %v539, 0.0
  %v556 = vadd.f32 %v540, 0.0
  %v557 = vadd.f32 %v541, 0.0
  %v558 = vadd.f32 %v542, 0.0
  %v559 = vadd.f32 %v543, 0.0
  %v560 = vadd.f32 %v544, 0.0
  %v561 = vadd.f32 %v545, 0.0
  %v562 = vadd.f32 %v546, 0.0
  %v563 = vadd.f32 %v547, 0.0
  %v564 = vadd.f32 %v548, 0.0
  %s565 = scalar_lea.vmem %s0, 128
  %v566 = vld [vmem:[%s565] sm:$0xff]
  %v567 = vld [vmem:[%s565 + $0x8] sm:$0xff]
  %v568 = vld [vmem:[%s565 + $0x10] sm:$0xff]
  %v569 = vld [vmem:[%s565 + $0x18] sm:$0xff]
  %v570 = vld [vmem:[%s565 + $0x20] sm:$0xff]
  %v571 = vld [vmem:[%s565 + $0x28] sm:$0xff]
  %v572 = vld [vmem:[%s565 + $0x30] sm:$0xff]
  %v573 = vld [vmem:[%s565 + $0x38] sm:$0xff]
  %v574 = vld [vmem:[%s565 + $0x40] sm:$0xff]
  %v575 = vld [vmem:[%s565 + $0x48] sm:$0xff]
  %v576 = vld [vmem:[%s565 + $0x50] sm:$0xff]
  %v577 = vld [vmem:[%s565 + $0x58] sm:$0xff]
  %v578 = vld [vmem:[%s565 + $0x60] sm:$0xff]
  %v579 = vld [vmem:[%s565 + $0x68] sm:$0xff]
  %v580 = vld [vmem:[%s565 + $0x70] sm:$0xff]
  %v581 = vld [vmem:[%s565 + $0x78] sm:$0xff]
  %s582 = sadd.s32 %s20, 128
  %s583 = scalar_lea.vmem %s0, %s582
  %v584 = vld [vmem:[%s583] sm:$0xff]
  %v585 = vld [vmem:[%s583 + $0x8] sm:$0xff]
  %v586 = vld [vmem:[%s583 + $0x10] sm:$0xff]
  %v587 = vld [vmem:[%s583 + $0x18] sm:$0xff]
  %v588 = vld [vmem:[%s583 + $0x20] sm:$0xff]
  %v589 = vld [vmem:[%s583 + $0x28] sm:$0xff]
  %v590 = vld [vmem:[%s583 + $0x30] sm:$0xff]
  %v591 = vld [vmem:[%s583 + $0x38] sm:$0xff]
  %v592 = vld [vmem:[%s583 + $0x40] sm:$0xff]
  %v593 = vld [vmem:[%s583 + $0x48] sm:$0xff]
  %v594 = vld [vmem:[%s583 + $0x50] sm:$0xff]
  %v595 = vld [vmem:[%s583 + $0x58] sm:$0xff]
  %v596 = vld [vmem:[%s583 + $0x60] sm:$0xff]
  %v597 = vld [vmem:[%s583 + $0x68] sm:$0xff]
  %v598 = vld [vmem:[%s583 + $0x70] sm:$0xff]
  %v599 = vld [vmem:[%s583 + $0x78] sm:$0xff]
  %v600 = vld [vmem:[%s2 + $0x1] sm:$0x1]
  %v601 = vlaneseq
  %v602 = vshrl.u32 %v601, 7
  %v603 = vsub.s32 0, %v602
  %v604 = vrot.slane %v600, %v603
  %v605 = vmul.f32 %v584, %v604
  %v606 = vmul.f32 %v585, %v604
  %v607 = vmul.f32 %v586, %v604
  %v608 = vmul.f32 %v587, %v604
  %v609 = vmul.f32 %v588, %v604
  %v610 = vmul.f32 %v589, %v604
  %v611 = vmul.f32 %v590, %v604
  %v612 = vmul.f32 %v591, %v604
  %v613 = vmul.f32 %v592, %v604
  %v614 = vmul.f32 %v593, %v604
  %v615 = vmul.f32 %v594, %v604
  %v616 = vmul.f32 %v595, %v604
  %v617 = vmul.f32 %v596, %v604
  %v618 = vmul.f32 %v597, %v604
  %v619 = vmul.f32 %v598, %v604
  %v620 = vmul.f32 %v599, %v604
  %621 = vadd.xlane.f32.xlu0 %v605
  %v622 = vpop.xlane.xlu0 %621
  %623 = vadd.xlane.f32.xlu0 %v606
  %v624 = vpop.xlane.xlu0 %623
  %625 = vadd.xlane.f32.xlu0 %v607
  %v626 = vpop.xlane.xlu0 %625
  %627 = vadd.xlane.f32.xlu0 %v608
  %v628 = vpop.xlane.xlu0 %627
  %629 = vadd.xlane.f32.xlu0 %v609
  %v630 = vpop.xlane.xlu0 %629
  %631 = vadd.xlane.f32.xlu0 %v610
  %v632 = vpop.xlane.xlu0 %631
  %633 = vadd.xlane.f32.xlu0 %v611
  %v634 = vpop.xlane.xlu0 %633
  %635 = vadd.xlane.f32.xlu0 %v612
  %v636 = vpop.xlane.xlu0 %635
  %637 = vadd.xlane.f32.xlu0 %v613
  %v638 = vpop.xlane.xlu0 %637
  %639 = vadd.xlane.f32.xlu0 %v614
  %v640 = vpop.xlane.xlu0 %639
  %641 = vadd.xlane.f32.xlu0 %v615
  %v642 = vpop.xlane.xlu0 %641
  %643 = vadd.xlane.f32.xlu0 %v616
  %v644 = vpop.xlane.xlu0 %643
  %645 = vadd.xlane.f32.xlu0 %v617
  %v646 = vpop.xlane.xlu0 %645
  %647 = vadd.xlane.f32.xlu0 %v618
  %v648 = vpop.xlane.xlu0 %647
  %649 = vadd.xlane.f32.xlu0 %v619
  %v650 = vpop.xlane.xlu0 %649
  %651 = vadd.xlane.f32.xlu0 %v620
  %v652 = vpop.xlane.xlu0 %651
  %v653 = vld [vmem:[%s1 + $0x1] sm:$0x1]
  %v654 = vlaneseq
  %v655 = vshrl.u32 %v654, 7
  %v656 = vsub.s32 0, %v655
  %v657 = vrot.slane %v653, %v656
  %v658 = vadd.f32 %v622, %v657
  %v659 = vadd.f32 %v624, %v657
  %v660 = vadd.f32 %v626, %v657
  %v661 = vadd.f32 %v628, %v657
  %v662 = vadd.f32 %v630, %v657
  %v663 = vadd.f32 %v632, %v657
  %v664 = vadd.f32 %v634, %v657
  %v665 = vadd.f32 %v636, %v657
  %v666 = vadd.f32 %v638, %v657
  %v667 = vadd.f32 %v640, %v657
  %v668 = vadd.f32 %v642, %v657
  %v669 = vadd.f32 %v644, %v657
  %v670 = vadd.f32 %v646, %v657
  %v671 = vadd.f32 %v648, %v657
  %v672 = vadd.f32 %v650, %v657
  %v673 = vadd.f32 %v652, %v657
  %vm674 = vcmp.gt.f32.partialorder %v658, 0.0
  %vm675 = vcmp.gt.f32.partialorder %v659, 0.0
  %vm676 = vcmp.gt.f32.partialorder %v660, 0.0
  %vm677 = vcmp.gt.f32.partialorder %v661, 0.0
  %vm678 = vcmp.gt.f32.partialorder %v662, 0.0
  %vm679 = vcmp.gt.f32.partialorder %v663, 0.0
  %vm680 = vcmp.gt.f32.partialorder %v664, 0.0
  %vm681 = vcmp.gt.f32.partialorder %v665, 0.0
  %vm682 = vcmp.gt.f32.partialorder %v666, 0.0
  %vm683 = vcmp.gt.f32.partialorder %v667, 0.0
  %vm684 = vcmp.gt.f32.partialorder %v668, 0.0
  %vm685 = vcmp.gt.f32.partialorder %v669, 0.0
  %vm686 = vcmp.gt.f32.partialorder %v670, 0.0
  %vm687 = vcmp.gt.f32.partialorder %v671, 0.0
  %vm688 = vcmp.gt.f32.partialorder %v672, 0.0
  %vm689 = vcmp.gt.f32.partialorder %v673, 0.0
  %v690 = vmul.f32 %v658, 0.2
  %v691 = vmul.f32 %v659, 0.2
  %v692 = vmul.f32 %v660, 0.2
  %v693 = vmul.f32 %v661, 0.2
  %v694 = vmul.f32 %v662, 0.2
  %v695 = vmul.f32 %v663, 0.2
  %v696 = vmul.f32 %v664, 0.2
  %v697 = vmul.f32 %v665, 0.2
  %v698 = vmul.f32 %v666, 0.2
  %v699 = vmul.f32 %v667, 0.2
  %v700 = vmul.f32 %v668, 0.2
  %v701 = vmul.f32 %v669, 0.2
  %v702 = vmul.f32 %v670, 0.2
  %v703 = vmul.f32 %v671, 0.2
  %v704 = vmul.f32 %v672, 0.2
  %v705 = vmul.f32 %v673, 0.2
  %v706 = vsel %vm674, %v658, %v690
  %v707 = vsel %vm675, %v659, %v691
  %v708 = vsel %vm676, %v660, %v692
  %v709 = vsel %vm677, %v661, %v693
  %v710 = vsel %vm678, %v662, %v694
  %v711 = vsel %vm679, %v663, %v695
  %v712 = vsel %vm680, %v664, %v696
  %v713 = vsel %vm681, %v665, %v697
  %v714 = vsel %vm682, %v666, %v698
  %v715 = vsel %vm683, %v667, %v699
  %v716 = vsel %vm684, %v668, %v700
  %v717 = vsel %vm685, %v669, %v701
  %v718 = vsel %vm686, %v670, %v702
  %v719 = vsel %vm687, %v671, %v703
  %v720 = vsel %vm688, %v672, %v704
  %v721 = vsel %vm689, %v673, %v705
  %v722 = vadd.f32 %v706, %v73
  %v723 = vadd.f32 %v707, %v74
  %v724 = vadd.f32 %v708, %v75
  %v725 = vadd.f32 %v709, %v76
  %v726 = vadd.f32 %v710, %v77
  %v727 = vadd.f32 %v711, %v78
  %v728 = vadd.f32 %v712, %v79
  %v729 = vadd.f32 %v713, %v80
  %v730 = vadd.f32 %v714, %v81
  %v731 = vadd.f32 %v715, %v82
  %v732 = vadd.f32 %v716, %v83
  %v733 = vadd.f32 %v717, %v84
  %v734 = vadd.f32 %v718, %v85
  %v735 = vadd.f32 %v719, %v86
  %v736 = vadd.f32 %v720, %v87
  %v737 = vadd.f32 %v721, %v88
  %738 = vmax.xlane.f32.xlu0 %v722
  %v739 = vpop.xlane.xlu0 %738
  %740 = vmax.xlane.f32.xlu0 %v723
  %v741 = vpop.xlane.xlu0 %740
  %742 = vmax.xlane.f32.xlu0 %v724
  %v743 = vpop.xlane.xlu0 %742
  %744 = vmax.xlane.f32.xlu0 %v725
  %v745 = vpop.xlane.xlu0 %744
  %746 = vmax.xlane.f32.xlu0 %v726
  %v747 = vpop.xlane.xlu0 %746
  %748 = vmax.xlane.f32.xlu0 %v727
  %v749 = vpop.xlane.xlu0 %748
  %750 = vmax.xlane.f32.xlu0 %v728
  %v751 = vpop.xlane.xlu0 %750
  %752 = vmax.xlane.f32.xlu0 %v729
  %v753 = vpop.xlane.xlu0 %752
  %754 = vmax.xlane.f32.xlu0 %v730
  %v755 = vpop.xlane.xlu0 %754
  %756 = vmax.xlane.f32.xlu0 %v731
  %v757 = vpop.xlane.xlu0 %756
  %758 = vmax.xlane.f32.xlu0 %v732
  %v759 = vpop.xlane.xlu0 %758
  %760 = vmax.xlane.f32.xlu0 %v733
  %v761 = vpop.xlane.xlu0 %760
  %762 = vmax.xlane.f32.xlu0 %v734
  %v763 = vpop.xlane.xlu0 %762
  %764 = vmax.xlane.f32.xlu0 %v735
  %v765 = vpop.xlane.xlu0 %764
  %766 = vmax.xlane.f32.xlu0 %v736
  %v767 = vpop.xlane.xlu0 %766
  %768 = vmax.xlane.f32.xlu0 %v737
  %v769 = vpop.xlane.xlu0 %768
  %v770 = vsub.f32 %v722, %v739
  %v771 = vsub.f32 %v723, %v741
  %v772 = vsub.f32 %v724, %v743
  %v773 = vsub.f32 %v725, %v745
  %v774 = vsub.f32 %v726, %v747
  %v775 = vsub.f32 %v727, %v749
  %v776 = vsub.f32 %v728, %v751
  %v777 = vsub.f32 %v729, %v753
  %v778 = vsub.f32 %v730, %v755
  %v779 = vsub.f32 %v731, %v757
  %v780 = vsub.f32 %v732, %v759
  %v781 = vsub.f32 %v733, %v761
  %v782 = vsub.f32 %v734, %v763
  %v783 = vsub.f32 %v735, %v765
  %v784 = vsub.f32 %v736, %v767
  %v785 = vsub.f32 %v737, %v769
  %v786 = vmul.f32 %v770, 1.442695
  %v787 = vpow.pop %v786
  %v788 = vmul.f32 %v771, 1.442695
  %v789 = vpow.pop %v788
  %v790 = vmul.f32 %v772, 1.442695
  %v791 = vpow.pop %v790
  %v792 = vmul.f32 %v773, 1.442695
  %v793 = vpow.pop %v792
  %v794 = vmul.f32 %v774, 1.442695
  %v795 = vpow.pop %v794
  %v796 = vmul.f32 %v775, 1.442695
  %v797 = vpow.pop %v796
  %v798 = vmul.f32 %v776, 1.442695
  %v799 = vpow.pop %v798
  %v800 = vmul.f32 %v777, 1.442695
  %v801 = vpow.pop %v800
  %v802 = vmul.f32 %v778, 1.442695
  %v803 = vpow.pop %v802
  %v804 = vmul.f32 %v779, 1.442695
  %v805 = vpow.pop %v804
  %v806 = vmul.f32 %v780, 1.442695
  %v807 = vpow.pop %v806
  %v808 = vmul.f32 %v781, 1.442695
  %v809 = vpow.pop %v808
  %v810 = vmul.f32 %v782, 1.442695
  %v811 = vpow.pop %v810
  %v812 = vmul.f32 %v783, 1.442695
  %v813 = vpow.pop %v812
  %v814 = vmul.f32 %v784, 1.442695
  %v815 = vpow.pop %v814
  %v816 = vmul.f32 %v785, 1.442695
  %v817 = vpow.pop %v816
  %818 = vadd.xlane.f32.xlu0 %v787
  %v819 = vpop.xlane.xlu0 %818
  %820 = vadd.xlane.f32.xlu0 %v789
  %v821 = vpop.xlane.xlu0 %820
  %822 = vadd.xlane.f32.xlu0 %v791
  %v823 = vpop.xlane.xlu0 %822
  %824 = vadd.xlane.f32.xlu0 %v793
  %v825 = vpop.xlane.xlu0 %824
  %826 = vadd.xlane.f32.xlu0 %v795
  %v827 = vpop.xlane.xlu0 %826
  %828 = vadd.xlane.f32.xlu0 %v797
  %v829 = vpop.xlane.xlu0 %828
  %830 = vadd.xlane.f32.xlu0 %v799
  %v831 = vpop.xlane.xlu0 %830
  %832 = vadd.xlane.f32.xlu0 %v801
  %v833 = vpop.xlane.xlu0 %832
  %834 = vadd.xlane.f32.xlu0 %v803
  %v835 = vpop.xlane.xlu0 %834
  %836 = vadd.xlane.f32.xlu0 %v805
  %v837 = vpop.xlane.xlu0 %836
  %838 = vadd.xlane.f32.xlu0 %v807
  %v839 = vpop.xlane.xlu0 %838
  %840 = vadd.xlane.f32.xlu0 %v809
  %v841 = vpop.xlane.xlu0 %840
  %842 = vadd.xlane.f32.xlu0 %v811
  %v843 = vpop.xlane.xlu0 %842
  %844 = vadd.xlane.f32.xlu0 %v813
  %v845 = vpop.xlane.xlu0 %844
  %846 = vadd.xlane.f32.xlu0 %v815
  %v847 = vpop.xlane.xlu0 %846
  %848 = vadd.xlane.f32.xlu0 %v817
  %v849 = vpop.xlane.xlu0 %848
  %850 = vmatprep.subr.mxu0 0.0
  %851 = vmatpush1.msra.mxu0 %v566
  %852 = vmatprep.subr.mxu0 0.0
  %853 = vmatpush1.msra.mxu0 %v567
  %854 = vmatprep.subr.mxu0 0.0
  %855 = vmatpush1.msra.mxu0 %v568
  %856 = vmatprep.subr.mxu0 0.0
  %857 = vmatpush1.msra.mxu0 %v569
  %858 = vmatprep.subr.mxu0 0.0
  %859 = vmatpush1.msra.mxu0 %v570
  %860 = vmatprep.subr.mxu0 0.0
  %861 = vmatpush1.msra.mxu0 %v571
  %862 = vmatprep.subr.mxu0 0.0
  %863 = vmatpush1.msra.mxu0 %v572
  %864 = vmatprep.subr.mxu0 0.0
  %865 = vmatpush1.msra.mxu0 %v573
  %866 = vmatprep.subr.mxu0 0.0
  %867 = vmatpush1.msra.mxu0 %v574
  %868 = vmatprep.subr.mxu0 0.0
  %869 = vmatpush1.msra.mxu0 %v575
  %870 = vmatprep.subr.mxu0 0.0
  %871 = vmatpush1.msra.mxu0 %v576
  %872 = vmatprep.subr.mxu0 0.0
  %873 = vmatpush1.msra.mxu0 %v577
  %874 = vmatprep.subr.mxu0 0.0
  %875 = vmatpush1.msra.mxu0 %v578
  %876 = vmatprep.subr.mxu0 0.0
  %877 = vmatpush1.msra.mxu0 %v579
  %878 = vmatprep.subr.mxu0 0.0
  %879 = vmatpush1.msra.mxu0 %v580
  %880 = vmatprep.subr.mxu0 0.0
  %881 = vmatpush1.msra.mxu0 %v581
  %882 = vmatprep.subr.mxu0 0.0
  %883 = vmatpush1.msra.mxu0 0.0
  %884 = vmatprep.subr.mxu0 0.0
  %885 = vmatpush1.msra.mxu0 0.0
  %886 = vmatprep.subr.mxu0 0.0
  %887 = vmatpush1.msra.mxu0 0.0
  %888 = vmatprep.subr.mxu0 0.0
  %889 = vmatpush1.msra.mxu0 0.0
  %890 = vmatprep.subr.mxu0 0.0
  %891 = vmatpush1.msra.mxu0 0.0
  %892 = vmatprep.subr.mxu0 0.0
  %893 = vmatpush1.msra.mxu0 0.0
  %894 = vmatprep.subr.mxu0 0.0
  %895 = vmatpush1.msra.mxu0 0.0
  %896 = vmatprep.subr.mxu0 0.0
  %897 = vmatpush1.msra.mxu0 0.0
  %898 = vmatprep.subr.mxu0 0.0
  %899 = vmatpush1.msra.mxu0 0.0
  %900 = vmatprep.subr.mxu0 0.0
  %901 = vmatpush1.msra.mxu0 0.0
  %902 = vmatprep.subr.mxu0 0.0
  %903 = vmatpush1.msra.mxu0 0.0
  %904 = vmatprep.subr.mxu0 0.0
  %905 = vmatpush1.msra.mxu0 0.0
  %906 = vmatprep.subr.mxu0 0.0
  %907 = vmatpush1.msra.mxu0 0.0
  %908 = vmatprep.subr.mxu0 0.0
  %909 = vmatpush1.msra.mxu0 0.0
  %910 = vmatprep.subr.mxu0 0.0
  %911 = vmatpush1.msra.mxu0 0.0
  %912 = vmatprep.subr.mxu0 0.0
  %913 = vmatpush1.msra.mxu0 0.0
  %914 = vmatprep.mubr.f32.mxu0 0.0
  %915 = vmatmul.mubr.f32.gmra.mrb[0].mxu0 %v787
  %v916 = vpop.f32.mrb[0].mxu0
  %v917 = vadd.f32 0.0, %v916
  %v918 = vpop.f32.mrb[0].mxu0
  %919 = vmatprep.mubr.f32.mxu0 0.0
  %920 = vmatmul.mubr.f32.gmra.mrb[0].mxu0 %v789
  %v921 = vpop.f32.mrb[0].mxu0
  %v922 = vadd.f32 0.0, %v921
  %v923 = vpop.f32.mrb[0].mxu0
  %924 = vmatprep.mubr.f32.mxu0 0.0
  %925 = vmatmul.mubr.f32.gmra.mrb[0].mxu0 %v791
  %v926 = vpop.f32.mrb[0].mxu0
  %v927 = vadd.f32 0.0, %v926
  %v928 = vpop.f32.mrb[0].mxu0
  %929 = vmatprep.mubr.f32.mxu0 0.0
  %930 = vmatmul.mubr.f32.gmra.mrb[0].mxu0 %v793
  %v931 = vpop.f32.mrb[0].mxu0
  %v932 = vadd.f32 0.0, %v931
  %v933 = vpop.f32.mrb[0].mxu0
  %934 = vmatprep.mubr.f32.mxu0 0.0
  %935 = vmatmul.mubr.f32.gmra.mrb[0].mxu0 %v795
  %v936 = vpop.f32.mrb[0].mxu0
  %v937 = vadd.f32 0.0, %v936
  %v938 = vpop.f32.mrb[0].mxu0
  %939 = vmatprep.mubr.f32.mxu0 0.0
  %940 = vmatmul.mubr.f32.gmra.mrb[0].mxu0 %v797
  %v941 = vpop.f32.mrb[0].mxu0
  %v942 = vadd.f32 0.0, %v941
  %v943 = vpop.f32.mrb[0].mxu0
  %944 = vmatprep.mubr.f32.mxu0 0.0
  %945 = vmatmul.mubr.f32.gmra.mrb[0].mxu0 %v799
  %v946 = vpop.f32.mrb[0].mxu0
  %v947 = vadd.f32 0.0, %v946
  %v948 = vpop.f32.mrb[0].mxu0
  %949 = vmatprep.mubr.f32.mxu0 0.0
  %950 = vmatmul.mubr.f32.gmra.mrb[0].mxu0 %v801
  %v951 = vpop.f32.mrb[0].mxu0
  %v952 = vadd.f32 0.0, %v951
  %v953 = vpop.f32.mrb[0].mxu0
  %954 = vmatprep.mubr.f32.mxu0 0.0
  %955 = vmatmul.mubr.f32.gmra.mrb[0].mxu0 %v803
  %v956 = vpop.f32.mrb[0].mxu0
  %v957 = vadd.f32 0.0, %v956
  %v958 = vpop.f32.mrb[0].mxu0
  %959 = vmatprep.mubr.f32.mxu0 0.0
  %960 = vmatmul.mubr.f32.gmra.mrb[0].mxu0 %v805
  %v961 = vpop.f32.mrb[0].mxu0
  %v962 = vadd.f32 0.0, %v961
  %v963 = vpop.f32.mrb[0].mxu0
  %964 = vmatprep.mubr.f32.mxu0 0.0
  %965 = vmatmul.mubr.f32.gmra.mrb[0].mxu0 %v807
  %v966 = vpop.f32.mrb[0].mxu0
  %v967 = vadd.f32 0.0, %v966
  %v968 = vpop.f32.mrb[0].mxu0
  %969 = vmatprep.mubr.f32.mxu0 0.0
  %970 = vmatmul.mubr.f32.gmra.mrb[0].mxu0 %v809
  %v971 = vpop.f32.mrb[0].mxu0
  %v972 = vadd.f32 0.0, %v971
  %v973 = vpop.f32.mrb[0].mxu0
  %974 = vmatprep.mubr.f32.mxu0 0.0
  %975 = vmatmul.mubr.f32.gmra.mrb[0].mxu0 %v811
  %v976 = vpop.f32.mrb[0].mxu0
  %v977 = vadd.f32 0.0, %v976
  %v978 = vpop.f32.mrb[0].mxu0
  %979 = vmatprep.mubr.f32.mxu0 0.0
  %980 = vmatmul.mubr.f32.gmra.mrb[0].mxu0 %v813
  %v981 = vpop.f32.mrb[0].mxu0
  %v982 = vadd.f32 0.0, %v981
  %v983 = vpop.f32.mrb[0].mxu0
  %984 = vmatprep.mubr.f32.mxu0 0.0
  %985 = vmatmul.mubr.f32.gmra.mrb[0].mxu0 %v815
  %v986 = vpop.f32.mrb[0].mxu0
  %v987 = vadd.f32 0.0, %v986
  %v988 = vpop.f32.mrb[0].mxu0
  %989 = vmatprep.mubr.f32.mxu0 0.0
  %990 = vmatmul.mubr.f32.gmra.mrb[0].mxu0 %v817
  %v991 = vpop.f32.mrb[0].mxu0
  %v992 = vadd.f32 0.0, %v991
  %v993 = vpop.f32.mrb[0].mxu0
  %994 = vdwg.mxu0
  %v995 = vrcp.pop %v819
  %v996 = vrcp.pop %v821
  %v997 = vrcp.pop %v823
  %v998 = vrcp.pop %v825
  %v999 = vrcp.pop %v827
  %v1000 = vrcp.pop %v829
  %v1001 = vrcp.pop %v831
  %v1002 = vrcp.pop %v833
  %v1003 = vrcp.pop %v835
  %v1004 = vrcp.pop %v837
  %v1005 = vrcp.pop %v839
  %v1006 = vrcp.pop %v841
  %v1007 = vrcp.pop %v843
  %v1008 = vrcp.pop %v845
  %v1009 = vrcp.pop %v847
  %v1010 = vrcp.pop %v849
  %v1011 = vmul.f32 %v917, %v995
  %v1012 = vmul.f32 %v922, %v996
  %v1013 = vmul.f32 %v927, %v997
  %v1014 = vmul.f32 %v932, %v998
  %v1015 = vmul.f32 %v937, %v999
  %v1016 = vmul.f32 %v942, %v1000
  %v1017 = vmul.f32 %v947, %v1001
  %v1018 = vmul.f32 %v952, %v1002
  %v1019 = vmul.f32 %v957, %v1003
  %v1020 = vmul.f32 %v962, %v1004
  %v1021 = vmul.f32 %v967, %v1005
  %v1022 = vmul.f32 %v972, %v1006
  %v1023 = vmul.f32 %v977, %v1007
  %v1024 = vmul.f32 %v982, %v1008
  %v1025 = vmul.f32 %v987, %v1009
  %v1026 = vmul.f32 %v992, %v1010
  %v1027 = vadd.f32 %v549, %v1011
  %v1028 = vadd.f32 %v550, %v1012
  %v1029 = vadd.f32 %v551, %v1013
  %v1030 = vadd.f32 %v552, %v1014
  %v1031 = vadd.f32 %v553, %v1015
  %v1032 = vadd.f32 %v554, %v1016
  %v1033 = vadd.f32 %v555, %v1017
  %v1034 = vadd.f32 %v556, %v1018
  %v1035 = vadd.f32 %v557, %v1019
  %v1036 = vadd.f32 %v558, %v1020
  %v1037 = vadd.f32 %v559, %v1021
  %v1038 = vadd.f32 %v560, %v1022
  %v1039 = vadd.f32 %v561, %v1023
  %v1040 = vadd.f32 %v562, %v1024
  %v1041 = vadd.f32 %v563, %v1025
  %v1042 = vadd.f32 %v564, %v1026
  %v1043 = vmul.f32 %v1027, 0.5
  %v1044 = vmul.f32 %v1028, 0.5
  %v1045 = vmul.f32 %v1029, 0.5
  %v1046 = vmul.f32 %v1030, 0.5
  %v1047 = vmul.f32 %v1031, 0.5
  %v1048 = vmul.f32 %v1032, 0.5
  %v1049 = vmul.f32 %v1033, 0.5
  %v1050 = vmul.f32 %v1034, 0.5
  %v1051 = vmul.f32 %v1035, 0.5
  %v1052 = vmul.f32 %v1036, 0.5
  %v1053 = vmul.f32 %v1037, 0.5
  %v1054 = vmul.f32 %v1038, 0.5
  %v1055 = vmul.f32 %v1039, 0.5
  %v1056 = vmul.f32 %v1040, 0.5
  %v1057 = vmul.f32 %v1041, 0.5
  %v1058 = vmul.f32 %v1042, 0.5
  %v1059 = vld [vmem:[%s3] sm:$0x1]
  %v1061 = vlaneseq
  %v1062 = vshrl.u32 %v1061, 7
  %v1063 = vsub.s32 0, %v1062
  %v1064 = vrot.slane %v1059, %v1063
  %v1066 = vadd.f32 %v1043, %v1064
  %v1067 = vadd.f32 %v1044, %v1064
  %v1068 = vadd.f32 %v1045, %v1064
  %v1069 = vadd.f32 %v1046, %v1064
  %v1070 = vadd.f32 %v1047, %v1064
  %v1071 = vadd.f32 %v1048, %v1064
  %v1072 = vadd.f32 %v1049, %v1064
  %v1073 = vadd.f32 %v1050, %v1064
  %v1074 = vadd.f32 %v1051, %v1064
  %v1075 = vadd.f32 %v1052, %v1064
  %v1076 = vadd.f32 %v1053, %v1064
  %v1077 = vadd.f32 %v1054, %v1064
  %v1078 = vadd.f32 %v1055, %v1064
  %v1079 = vadd.f32 %v1056, %v1064
  %v1080 = vadd.f32 %v1057, %v1064
  %v1081 = vadd.f32 %v1058, %v1064
  %1082 = vst [vmem:[%s5] sm:$0xff] %v1066
  %1083 = vst [vmem:[%s5 + $0x8] sm:$0xff] %v1067
  %1084 = vst [vmem:[%s5 + $0x10] sm:$0xff] %v1068
  %1085 = vst [vmem:[%s5 + $0x18] sm:$0xff] %v1069
  %1086 = vst [vmem:[%s5 + $0x20] sm:$0xff] %v1070
  %1087 = vst [vmem:[%s5 + $0x28] sm:$0xff] %v1071
  %1088 = vst [vmem:[%s5 + $0x30] sm:$0xff] %v1072
  %1089 = vst [vmem:[%s5 + $0x38] sm:$0xff] %v1073
  %1090 = vst [vmem:[%s5 + $0x40] sm:$0xff] %v1074
  %1091 = vst [vmem:[%s5 + $0x48] sm:$0xff] %v1075
  %1092 = vst [vmem:[%s5 + $0x50] sm:$0xff] %v1076
  %1093 = vst [vmem:[%s5 + $0x58] sm:$0xff] %v1077
  %1094 = vst [vmem:[%s5 + $0x60] sm:$0xff] %v1078
  %1095 = vst [vmem:[%s5 + $0x68] sm:$0xff] %v1079
  %1096 = vst [vmem:[%s5 + $0x70] sm:$0xff] %v1080
  %1097 = vst [vmem:[%s5 + $0x78] sm:$0xff] %v1081
  // Predicated region
  $region22: #{gat_forward.5} parent=0 // pred_check
    _
  $region23: #{gat_forward.5} parent=0 // pred_check_branch
    %1099 = sbr.rel (0) target = $region25
  $region24: #{gat_forward.5} parent=0 // pred_region
    _
  $region25: #{gat_forward.5} parent=0 // pred_fallthru
    _
  // Predicated region
  $region26: #{gat_forward.5} parent=0 // pred_check
    _
  $region27: #{gat_forward.5} parent=0 // pred_check_branch
    %1101 = sbr.rel (0) target = $region29
  $region28: #{gat_forward.5} parent=0 // pred_region
    _
  $region29: #{gat_forward.5} parent=0 // pred_fallthru
    _

</llo_original>
